<compile_context>
chip_gen: v5e
topology: v5e:2x2
jax: 0.10.0
libtpu: 0.0.40
codegen_flags: <defaults>
</compile_context>

<pallas_src>
import jax
import jax.numpy as jnp
from jax.experimental import pallas as pl
from jax.experimental.pallas import tpu as pltpu


def _round_up(x, m):
    return ((x + m - 1) // m) * m


def _vmem_budgets():
    """Returns (tile working-set budget, compiler vmem limit) in bytes,
    derived from the actual chip so a v6e-tuned budget is never ported to
    v7x's smaller (64 MiB per-core) VMEM."""
    try:
        cap = int(pltpu.get_tpu_info().vmem_capacity_bytes)
    except Exception:
        cap = 64 * 1024 * 1024  # conservative: v7x per-TensorCore size
    budget = min(24 * 1024 * 1024, cap // 4)
    limit = min(48 * 1024 * 1024, cap // 2)
    limit = max(limit, 2 * budget)
    return budget, int(limit)


def _pick_batch_tile(b_pad, per_elem_bytes, fixed_bytes, budget_bytes, max_tb):
    """Largest multiple-of-128 tile dividing b_pad that (a) keeps the full
    pipelined working set (double-buffered inputs, biases, output, temps and
    any resident tables) under the budget and (b) leaves the parallel grid
    axis with >= 2 steps whenever b_pad allows it (v7x has 2 TensorCores)."""
    avail = max(budget_bytes - fixed_bytes, 128 * per_elem_bytes)
    cap = (avail // per_elem_bytes) // 128 * 128
    cap = min(cap, max_tb, b_pad)
    if b_pad >= 256:
        cap = min(cap, b_pad // 2)  # guarantee >= 2 grid steps
    cap = max(cap, 128)
    best = 128
    for t in range(128, cap + 1, 128):
        if b_pad % t == 0:
            best = t
    return best


# ----------------------------------------------------------------------------
# Kernel 1: fused in-kernel gather (small vocab), one-hot MXU gather.
# ----------------------------------------------------------------------------
def _glove_fused_kernel(c_idx_ref, s_idx_ref, c_tab_ref, s_tab_ref, out_ref):
    # c_idx_ref / s_idx_ref : [1, TB]   int32 lane-dense index rows
    # c_tab_ref / s_tab_ref : [Daug, V] VMEM-resident bias-augmented tables
    #                         (constant block index -> DMA'd once)
    # out_ref               : [1, TB]   f32, single lane-dense store
    vocab = c_tab_ref.shape[1]
    tb = out_ref.shape[1]
    vocab_iota = jax.lax.broadcasted_iota(jnp.int32, (vocab, tb), 0)
    onehot_c = (vocab_iota == c_idx_ref[...]).astype(c_tab_ref.dtype)  # [V, TB]
    onehot_s = (vocab_iota == s_idx_ref[...]).astype(s_tab_ref.dtype)  # [V, TB]
    # One-hot gather on the MXU: [Daug, V] @ [V, TB] -> [Daug, TB].
    c_g = jnp.dot(c_tab_ref[...], onehot_c, preferred_element_type=jnp.float32)
    s_g = jnp.dot(s_tab_ref[...], onehot_s, preferred_element_type=jnp.float32)
    # The augmented rows carry (bias_c, 1) / (1, bias_s), so this reduction
    # already includes c_b + s_b.
    out_ref[...] = jnp.sum(c_g * s_g, axis=0, keepdims=True)


def _glove_fused_forward(c_idx_row, s_idx_row, c_tab, s_tab, *, max_tb=8192):
    """c_idx_row/s_idx_row: [1, B_pad] int32; c_tab/s_tab: [Daug, V] tables.
    Returns [1, B_pad] float32 scores (biases included)."""
    daug, vocab = c_tab.shape
    _, b_pad = c_idx_row.shape
    itemsize = jnp.dtype(c_tab.dtype).itemsize

    budget, vmem_limit = _vmem_budgets()
    fixed = 4 * daug * vocab * itemsize              # 2 tables x 2 buffers
    per_b = 2 * vocab * itemsize + 12 * daug + 64    # onehots + gathered + prod + idx/out
    tb = _pick_batch_tile(b_pad, per_b, fixed, budget, max_tb)
    grid = (b_pad // tb,)

    idx_spec = pl.BlockSpec((1, tb), lambda i: (0, i))
    tab_spec = pl.BlockSpec((daug, vocab), lambda i: (0, 0))  # resident, fetched once
    out_spec = pl.BlockSpec((1, tb), lambda i: (0, i))

    cost = pl.CostEstimate(
        flops=int(4 * daug * vocab * b_pad + 3 * daug * b_pad),
        transcendentals=0,
        bytes_accessed=int(2 * daug * vocab * itemsize + 2 * b_pad * 4 + b_pad * 4),
    )

    return pl.pallas_call(
        _glove_fused_kernel,
        out_shape=jax.ShapeDtypeStruct((1, b_pad), jnp.float32),
        grid_spec=pltpu.PrefetchScalarGridSpec(
            num_scalar_prefetch=0,
            grid=grid,
            in_specs=[idx_spec, idx_spec, tab_spec, tab_spec],
            out_specs=out_spec,
        ),
        compiler_params=pltpu.CompilerParams(
            dimension_semantics=("parallel",),
            vmem_limit_bytes=vmem_limit,
        ),
        cost_estimate=cost,
    )(c_idx_row, s_idx_row, c_tab, s_tab)


def _augmented_tables(params):
    """Transposed [Daug_pad, V] tables with biases folded in:
       c columns = [c_weight ; c_bias ; 1 ; 0-pad],
       s columns = [s_weight ; 1 ; s_bias ; 0-pad],
    so sum over rows of (gathered_c * gathered_s) = dot(c_w, s_w) + c_b + s_b."""
    vocab, _ = params.c_weight.shape
    dt = params.c_weight.dtype
    ones = jnp.ones((vocab, 1), dt)
    c_aug = jnp.concatenate([params.c_weight, params.c_biase.astype(dt), ones], axis=1)
    s_aug = jnp.concatenate([params.s_weight, ones, params.s_biase.astype(dt)], axis=1)
    daug = c_aug.shape[1]
    daug_pad = _round_up(daug, 8)
    if daug_pad != daug:
        zpad = ((0, 0), (0, daug_pad - daug))
        c_aug = jnp.pad(c_aug, zpad)
        s_aug = jnp.pad(s_aug, zpad)
    return c_aug.T, s_aug.T  # small tables only: transpose cost is negligible


# ----------------------------------------------------------------------------
# Kernel 2: fallback for large vocab -- XLA gather, natural [B, D] layout.
# ----------------------------------------------------------------------------
def _glove_gathered_kernel(c_w_ref, s_w_ref, c_b_ref, s_b_ref, out_ref):
    # c_w_ref / s_w_ref : [TB, D] gathered embeddings (no wrapper transpose)
    # c_b_ref / s_b_ref : [TB, 1] f32
    # out_ref           : [TB, 1] f32
    c_w = c_w_ref[...].astype(jnp.float32)  # upcast first: safe on v5e (no bf16 VPU)
    s_w = s_w_ref[...].astype(jnp.float32)
    dot = jnp.sum(c_w * s_w, axis=-1, keepdims=True)
    out_ref[...] = dot + c_b_ref[...].astype(jnp.float32) + s_b_ref[...].astype(jnp.float32)


def _glove_gathered_forward(c_w, s_w, c_b, s_b, *, max_tb=8192):
    """c_w/s_w: [B_pad, D] gathered embeddings (f32 or bf16);
    c_b/s_b: [B_pad, 1] f32.  Returns [B_pad, 1] f32 scores."""
    b_pad, embed_dim = c_w.shape
    itemsize = jnp.dtype(c_w.dtype).itemsize

    budget, vmem_limit = _vmem_budgets()
    # 2 vec inputs x 2 buffers + upcast temps + product temp + biases + output
    per_b = 4 * embed_dim * itemsize + 12 * embed_dim + 40
    tb = _pick_batch_tile(b_pad, per_b, 0, budget, max_tb)
    grid = (b_pad // tb,)

    vec_spec = pl.BlockSpec((tb, embed_dim), lambda i: (i, 0))
    col_spec = pl.BlockSpec((tb, 1), lambda i: (i, 0))

    cost = pl.CostEstimate(
        flops=int(2 * b_pad * embed_dim + 2 * b_pad),
        transcendentals=0,
        bytes_accessed=int(2 * b_pad * embed_dim * itemsize + 3 * b_pad * 4),
    )

    return pl.pallas_call(
        _glove_gathered_kernel,
        out_shape=jax.ShapeDtypeStruct((b_pad, 1), jnp.float32),
        grid_spec=pltpu.PrefetchScalarGridSpec(
            num_scalar_prefetch=0,
            grid=grid,
            in_specs=[vec_spec, vec_spec, col_spec, col_spec],
            out_specs=col_spec,
        ),
        compiler_params=pltpu.CompilerParams(
            dimension_semantics=("parallel",),
            vmem_limit_bytes=vmem_limit,
        ),
        cost_estimate=cost,
    )(c_w, s_w, c_b, s_b)


# ----------------------------------------------------------------------------
# Module wrapper
# ----------------------------------------------------------------------------
class GloveParams:
    """Deterministic stand-in for the nn.Embedding tables (randn / 100)."""

    def __init__(self, vocab_size, embed_dim, key, dtype=jnp.float32):
        k0, k1, k2, k3 = jax.random.split(key, 4)
        init = lambda k, shape: (jax.random.normal(k, shape, jnp.float32) / 100.0).astype(dtype)
        self.c_weight = init(k0, (vocab_size, embed_dim))
        self.c_biase = init(k1, (vocab_size, 1))
        self.s_weight = init(k2, (vocab_size, embed_dim))
        self.s_biase = init(k3, (vocab_size, 1))

    def astype(self, dtype):
        p = object.__new__(GloveParams)
        p.c_weight = self.c_weight.astype(dtype)
        p.c_biase = self.c_biase.astype(dtype)
        p.s_weight = self.s_weight.astype(dtype)
        p.s_biase = self.s_biase.astype(dtype)
        return p


def glove_apply(params: GloveParams, c, s, *, fuse_gather=None, max_tb=8192):
    """Forward pass matching the PyTorch module.  Returns [B, 1] float32."""
    c = jnp.asarray(c).astype(jnp.int32)
    s = jnp.asarray(s).astype(jnp.int32)
    (batch,) = c.shape
    vocab, embed_dim = params.c_weight.shape
    itemsize = jnp.dtype(params.c_weight.dtype).itemsize

    if fuse_gather is None:
        daug_pad = _round_up(embed_dim + 2, 8)
        table_bytes = 2 * daug_pad * vocab * itemsize
        fuse_gather = (vocab <= 4096) and (table_bytes <= 4 * 1024 * 1024)

    # Pad the batch to a multiple of 128: keeps the tiled / pipelined /
    # megacore-shardable path even for unaligned production batches (index 0
    # is a valid row; padded scores are sliced off below).
    b_pad = _round_up(max(batch, 128), 128)
    pad = b_pad - batch
    c_p = jnp.pad(c, (0, pad))
    s_p = jnp.pad(s, (0, pad))

    if fuse_gather:
        c_tab, s_tab = _augmented_tables(params)
        out_row = _glove_fused_forward(
            c_p.reshape(1, b_pad), s_p.reshape(1, b_pad), c_tab, s_tab, max_tb=max_tb)
        out = out_row[0, :batch].reshape(batch, 1)
    else:
        # TODO(synk): for very large vocabularies, fuse this gather in-kernel
        # too (scalar-prefetched indices + per-row make_async_copy, pattern P4)
        # instead of letting XLA materialize [B, D] gathers in HBM.
        c_w = jnp.take(params.c_weight, c_p, axis=0)                       # [B_pad, D]
        s_w = jnp.take(params.s_weight, s_p, axis=0)                       # [B_pad, D]
        c_b = jnp.take(params.c_biase, c_p, axis=0).astype(jnp.float32)    # [B_pad, 1]
        s_b = jnp.take(params.s_biase, s_p, axis=0).astype(jnp.float32)    # [B_pad, 1]
        out_col = _glove_gathered_forward(c_w, s_w, c_b, s_b, max_tb=max_tb)
        out = out_col[:batch]
    return out


def glove_reference(params: GloveParams, c, s):
    c_w = params.c_weight.astype(jnp.float32)[c]
    s_w = params.s_weight.astype(jnp.float32)[s]
    c_b = params.c_biase.astype(jnp.float32)[c]
    s_b = params.s_biase.astype(jnp.float32)[s]
    return jnp.sum(c_w * s_w, axis=1, keepdims=True) + c_b + s_b


if __name__ == "__main__":
    VOCAB, EMBED_DIM, BATCH = 512, 32, 512

    key = jax.random.PRNGKey(0)
    pkey, ckey, skey = jax.random.split(key, 3)
    params = GloveParams(VOCAB, EMBED_DIM, pkey)

    c = jax.random.randint(ckey, (BATCH,), 0, VOCAB, dtype=jnp.int32)
    s = jax.random.randint(skey, (BATCH,), 0, VOCAB, dtype=jnp.int32)

    # 1) Fused-gather path (small vocab): one-hot MXU gather with VMEM-resident
    #    tables; HBM traffic = indices + tables (once) + scores only.
    fused_fn = jax.jit(lambda c, s: glove_apply(params, c, s))
    out_fused = jax.block_until_ready(fused_fn(c, s))
    assert out_fused.shape == (BATCH, 1) and out_fused.dtype == jnp.float32
    ref = glove_reference(params, c, s)
    max_err = float(jnp.max(jnp.abs(out_fused - ref)))
    assert max_err < 2e-3, f"fused path max abs err {max_err}"

    # 2) Pre-gathered fallback path ([B, D] blocks, no wrapper transpose), with
    #    a batch that is not a multiple of 128 to exercise the padding path.
    c2, s2 = c[:200], s[:200]
    gathered_fn = jax.jit(lambda c, s: glove_apply(params, c, s, fuse_gather=False))
    out_g = jax.block_until_ready(gathered_fn(c2, s2))
    assert out_g.shape == (200, 1) and out_g.dtype == jnp.float32
    ref2 = glove_reference(params, c2, s2)
    assert jnp.allclose(out_g, ref2, atol=1e-6, rtol=1e-5), "fallback path mismatch"

    # 3) bf16 tables on the fallback path (halves HBM bytes of the dominant
    #    gathered tensors; the kernel upcasts to f32 before the multiply).
    params_bf16 = params.astype(jnp.bfloat16)
    bf16_fn = jax.jit(lambda c, s: glove_apply(params_bf16, c, s, fuse_gather=False))
    out_bf = jax.block_until_ready(bf16_fn(c, s))
    ref_bf = glove_reference(params_bf16, c, s)
    assert jnp.allclose(out_bf, ref_bf, atol=1e-6, rtol=1e-5), "bf16 path mismatch"

    print("KERNEL_OK")
</pallas_src>

<mosaic_0001>
module attributes {stable_mosaic.version = 11 : i64} {
  func.func @_glove_fused_kernel(%arg0: i32, %arg1: memref<1x256xi32, #tpu.memory_space<vmem>>, %arg2: memref<1x256xi32, #tpu.memory_space<vmem>>, %arg3: memref<40x512xf32, #tpu.memory_space<vmem>>, %arg4: memref<40x512xf32, #tpu.memory_space<vmem>>, %arg5: memref<1x256xf32, #tpu.memory_space<vmem>>) attributes {dimension_semantics = [#tpu.dimension_semantics<parallel>], iteration_bounds = array<i64: 2>, scalar_prefetch = 0 : i64, scratch_operands = 0 : i64, tpu.core_type = #tpu.core_type<tc>, window_params = [{transform_indices = @transform_0, window_bounds = array<i64: 1, 256>}, {transform_indices = @transform_1, window_bounds = array<i64: 1, 256>}, {pipeline_mode = #tpu.pipeline_mode<synchronous>, transform_indices = @transform_2, window_bounds = array<i64: 40, 512>}, {pipeline_mode = #tpu.pipeline_mode<synchronous>, transform_indices = @transform_3, window_bounds = array<i64: 40, 512>}, {transform_indices = @transform_4, window_bounds = array<i64: 1, 256>}]} {
    %0 = tpu.iota {dimensions = array<i32: 0>} : vector<512x256xi32>
    %c0 = arith.constant 0 : index
    %c0_0 = arith.constant 0 : index
    %1 = vector.load %arg1[%c0, %c0_0] : memref<1x256xi32, #tpu.memory_space<vmem>>, vector<1x256xi32>
    %2 = vector.broadcast %1 : vector<1x256xi32> to vector<512x256xi32>
    %3 = arith.cmpi eq, %0, %2 : vector<512x256xi32>
    %4 = arith.extui %3 : vector<512x256xi1> to vector<512x256xi32>
    %5 = arith.sitofp %4 : vector<512x256xi32> to vector<512x256xf32>
    %c0_1 = arith.constant 0 : index
    %c0_2 = arith.constant 0 : index
    %6 = vector.load %arg2[%c0_1, %c0_2] : memref<1x256xi32, #tpu.memory_space<vmem>>, vector<1x256xi32>
    %7 = vector.broadcast %6 : vector<1x256xi32> to vector<512x256xi32>
    %8 = arith.cmpi eq, %0, %7 : vector<512x256xi32>
    %9 = arith.extui %8 : vector<512x256xi1> to vector<512x256xi32>
    %10 = arith.sitofp %9 : vector<512x256xi32> to vector<512x256xf32>
    %c0_3 = arith.constant 0 : index
    %c0_4 = arith.constant 0 : index
    %11 = vector.load %arg3[%c0_3, %c0_4] : memref<40x512xf32, #tpu.memory_space<vmem>>, vector<40x512xf32>
    %cst = arith.constant dense<0.000000e+00> : vector<40x256xf32>
    %12 = tpu.matmul %11, %5, %cst {dimension_numbers = #tpu.dot_dimension_numbers<[1], [0], [0], [1], [0, 0, 1, 1], [], []>} : vector<40x512xf32>, vector<512x256xf32>, vector<40x256xf32> -> vector<40x256xf32>
    %c0_5 = arith.constant 0 : index
    %c0_6 = arith.constant 0 : index
    %13 = vector.load %arg4[%c0_5, %c0_6] : memref<40x512xf32, #tpu.memory_space<vmem>>, vector<40x512xf32>
    %cst_7 = arith.constant dense<0.000000e+00> : vector<40x256xf32>
    %14 = tpu.matmul %13, %10, %cst_7 {dimension_numbers = #tpu.dot_dimension_numbers<[1], [0], [0], [1], [0, 0, 1, 1], [], []>} : vector<40x512xf32>, vector<512x256xf32>, vector<40x256xf32> -> vector<40x256xf32>
    %15 = arith.mulf %12, %14 : vector<40x256xf32>
    %cst_8 = arith.constant dense<0.000000e+00> : vector<256xf32>
    %16 = vector.multi_reduction <add>, %15, %cst_8 [0] : vector<40x256xf32> to vector<256xf32>
    %17 = vector.shape_cast %16 : vector<256xf32> to vector<1x256xf32>
    %c0_9 = arith.constant 0 : index
    %c0_10 = arith.constant 0 : index
    %18 = vector.load %arg5[%c0_9, %c0_10] : memref<1x256xf32, #tpu.memory_space<vmem>>, vector<1x256xf32>
    tpu.vector_store %arg5[%c0_9, %c0_10], %17 {strides = array<i32>} : memref<1x256xf32, #tpu.memory_space<vmem>>, vector<1x256xf32>,
    return
  }
  func.func @transform_0(%arg0: i32) -> (i32, i32) {
    %c0_i32 = arith.constant 0 : i32
    %c0_i32_0 = arith.constant 0 : i32
    return %c0_i32, %arg0 : i32, i32
  }
  func.func @transform_1(%arg0: i32) -> (i32, i32) {
    %c0_i32 = arith.constant 0 : i32
    %c0_i32_0 = arith.constant 0 : i32
    return %c0_i32, %arg0 : i32, i32
  }
  func.func @transform_2(%arg0: i32) -> (i32, i32) {
    %c0_i32 = arith.constant 0 : i32
    %c0_i32_0 = arith.constant 0 : i32
    %c0_i32_1 = arith.constant 0 : i32
    return %c0_i32, %c0_i32_0 : i32, i32
  }
  func.func @transform_3(%arg0: i32) -> (i32, i32) {
    %c0_i32 = arith.constant 0 : i32
    %c0_i32_0 = arith.constant 0 : i32
    %c0_i32_1 = arith.constant 0 : i32
    return %c0_i32, %c0_i32_0 : i32, i32
  }
  func.func @transform_4(%arg0: i32) -> (i32, i32) {
    %c0_i32 = arith.constant 0 : i32
    %c0_i32_0 = arith.constant 0 : i32
    return %c0_i32, %arg0 : i32, i32
  }
}

</mosaic_0001>

<llo_original>
// kernel: _lambda_.1
$region0: #{_lambda_.1}
  #allocation0 [shape = 'u32[]', space=smem, size = 0x4, offset = 0x4, fixed_abs, tag = 'smem constant byte address 0x4 - core index']
  #allocation1 [shape = 'u32[72,128]{1,0:T(1,128)}', space=vmem, size = 0x9000, scoped, tag = 'internal scratch']
  %s0 = inlined_call_operand.hbm [shape: s32[1,512], index: 0, kind: input, shape index: {}]
  %s1 = inlined_call_operand.hbm [shape: s32[1,512], index: 1, kind: input, shape index: {}]
  %s2 = inlined_call_operand.hbm [shape: f32[40,512], index: 2, kind: input, shape index: {}]
  %s3 = inlined_call_operand.hbm [shape: f32[40,512], index: 3, kind: input, shape index: {}]
  %s4 = inlined_call_operand.hbm [shape: f32[1,512], index: 4, kind: output, shape index: {}]
  %s5 = sld [smem:[#allocation0]]
  $region65: #{_lambda_.1} parent=0
    _
  %s7 = ssub.s32 1, %s5
  %s8 = scalar_select 0, %s7, %s5
  $region1: #{_lambda_.1} parent=0
    #allocation2 [shape = 'u8[2048]{0}', space=vmem, size = 0x800, scoped, tag = 'input window, operand 0']
    #allocation3 [shape = 's32[2]{0}', space=sflag, size = 0x8, scoped, tag = 'scoped memory for _lambda_.1']
    #allocation4 [shape = 's32[2]{0}', space=sflag, size = 0x8, scoped, tag = 'scoped memory for _lambda_.1']
    #allocation5 [shape = 'u8[2048]{0}', space=vmem, size = 0x800, scoped, tag = 'input window, operand 1']
    #allocation6 [shape = 's32[2]{0}', space=sflag, size = 0x8, scoped, tag = 'scoped memory for _lambda_.1']
    #allocation7 [shape = 'u8[81920]{0}', space=vmem, size = 0x14000, scoped, tag = 'input window, operand 2, single buffered']
    #allocation8 [shape = 'u8[81920]{0}', space=vmem, size = 0x14000, scoped, tag = 'input window, operand 3, single buffered']
    #allocation9 [shape = 's32[1]{0}', space=sflag, size = 0x4, scoped, tag = 'scoped memory for _lambda_.1']
    #allocation10 [shape = 'u8[2048]{0}', space=vmem, size = 0x800, scoped, tag = 'output window, operand 0']
    %9 = vsyncpa [#allocation3], 0
    %s10 = scalar_lea.sflag [#allocation3], 1
    %11 = vsyncpa %s10, 0
    %12 = vsyncpa [#allocation6], 0
    %s13 = scalar_lea.sflag [#allocation6], 1
    %14 = vsyncpa %s13, 0
    %15 = vsyncpa [#allocation9], 0
    %16 = vsyncpa [#allocation4], 0
    %s17 = scalar_lea.sflag [#allocation4], 1
    %18 = vsyncpa %s17, 0
    loop: start=0, step=1, limit=4
    $region2: #{_lambda_.1} parent=1 // loop_pre_header
      _
    $region3: #{_lambda_.1} parent=1 // loop_header
      %s20 = sphi 0, %s24
      %p21 = scmp.ge.s32.totalorder %s20, 4
      %s30 = sphi 0, %s32
      %s33 = sphi 0, %s30
      %s34 = sphi 0, %s33
      %s50 = sphi 0, %s34
      %s56 = sphi 0, %s58
      %s59 = sphi 0, %s56
      %s60 = sphi 0, %s59
      %s76 = sphi 0, %s60
      %s80 = sphi 0, %s80
      %s82 = sphi 0, %s80
      %s83 = sphi 0, %s82
      %s97 = sphi 0, %s83
      %s101 = sphi 0, %s101
      %s103 = sphi 0, %s101
      %s104 = sphi 0, %s103
      %s118 = sphi 0, %s104
      %s124 = sphi 0, %s126
      %s127 = sphi 0, %s124
      %s128 = sphi 0, %s127
      %s144 = sphi 0, %s128
    $region4: #{_lambda_.1} parent=1 // loop_header_branch
      %23 = sbr.rel (%p21) target = $region8
    $region5: #{_lambda_.1} parent=1 // loop_body
      %s25 = ssub.s32 %s20, 1
      %s26 = ssub.s32 %s20, 2
      %s27 = sadd.s32 %s20, 1
      %s28 = ssub.s32 %s20, %s27
      %p29 = scmp.eq.s32.totalorder %s28, 0
      %s31 = sadd.s32 %s30, 1
      %s32 = scalar_select %p29, %s30, %s31
      %p35 = pneg %p29
      %p36 = scmp.eq.s32.totalorder %s20, 1
      %p37 = por %p35, %p36
      %p38 = scmp.ne.s32.totalorder %s30, %s33
      %p39 = scmp.eq.s32.totalorder %s20, 0
      %p40 = por %p38, %p39
      %p41 = scmp.ne.s32.totalorder %s30, %s33
      %p42 = scmp.eq.s32.totalorder %s25, 1
      %p43 = por %p41, %p42
      %p44 = scmp.ne.s32.totalorder %s33, %s34
      %p45 = scmp.eq.s32.totalorder %s25, 0
      %p46 = por %p44, %p45
      %p47 = scmp.ne.s32.totalorder %s33, %s34
      %p48 = scmp.eq.s32.totalorder %s26, 1
      %p49 = por %p47, %p48
      %p51 = scmp.ne.s32.totalorder %s34, %s50
      %p52 = scmp.eq.s32.totalorder %s26, 0
      %p53 = por %p51, %p52
      %s54 = ssub.s32 %s20, %s27
      %p55 = scmp.eq.s32.totalorder %s54, 0
      %s57 = sadd.s32 %s56, 1
      %s58 = scalar_select %p55, %s56, %s57
      %p61 = pneg %p55
      %p62 = scmp.eq.s32.totalorder %s20, 1
      %p63 = por %p61, %p62
      %p64 = scmp.ne.s32.totalorder %s56, %s59
      %p65 = scmp.eq.s32.totalorder %s20, 0
      %p66 = por %p64, %p65
      %p67 = scmp.ne.s32.totalorder %s56, %s59
      %p68 = scmp.eq.s32.totalorder %s25, 1
      %p69 = por %p67, %p68
      %p70 = scmp.ne.s32.totalorder %s59, %s60
      %p71 = scmp.eq.s32.totalorder %s25, 0
      %p72 = por %p70, %p71
      %p73 = scmp.ne.s32.totalorder %s59, %s60
      %p74 = scmp.eq.s32.totalorder %s26, 1
      %p75 = por %p73, %p74
      %p77 = scmp.ne.s32.totalorder %s60, %s76
      %p78 = scmp.eq.s32.totalorder %s26, 0
      %p79 = por %p77, %p78
      %s81 = sadd.s32 %s80, 1
      %p84 = scmp.eq.s32.totalorder %s20, 1
      %p85 = scmp.ne.s32.totalorder %s80, %s82
      %p86 = scmp.eq.s32.totalorder %s20, 0
      %p87 = por %p85, %p86
      %p88 = scmp.ne.s32.totalorder %s80, %s82
      %p89 = scmp.eq.s32.totalorder %s25, 1
      %p90 = por %p88, %p89
      %p91 = scmp.ne.s32.totalorder %s82, %s83
      %p92 = scmp.eq.s32.totalorder %s25, 0
      %p93 = por %p91, %p92
      %p94 = scmp.ne.s32.totalorder %s82, %s83
      %p95 = scmp.eq.s32.totalorder %s26, 1
      %p96 = por %p94, %p95
      %p98 = scmp.ne.s32.totalorder %s83, %s97
      %p99 = scmp.eq.s32.totalorder %s26, 0
      %p100 = por %p98, %p99
      %s102 = sadd.s32 %s101, 1
      %p105 = scmp.eq.s32.totalorder %s20, 1
      %p106 = scmp.ne.s32.totalorder %s101, %s103
      %p107 = scmp.eq.s32.totalorder %s20, 0
      %p108 = por %p106, %p107
      %p109 = scmp.ne.s32.totalorder %s101, %s103
      %p110 = scmp.eq.s32.totalorder %s25, 1
      %p111 = por %p109, %p110
      %p112 = scmp.ne.s32.totalorder %s103, %s104
      %p113 = scmp.eq.s32.totalorder %s25, 0
      %p114 = por %p112, %p113
      %p115 = scmp.ne.s32.totalorder %s103, %s104
      %p116 = scmp.eq.s32.totalorder %s26, 1
      %p117 = por %p115, %p116
      %p119 = scmp.ne.s32.totalorder %s104, %s118
      %p120 = scmp.eq.s32.totalorder %s26, 0
      %p121 = por %p119, %p120
      %s122 = ssub.s32 %s20, %s27
      %p123 = scmp.eq.s32.totalorder %s122, 0
      %s125 = sadd.s32 %s124, 1
      %s126 = scalar_select %p123, %s124, %s125
      %p129 = pneg %p123
      %p130 = scmp.eq.s32.totalorder %s20, 1
      %p131 = por %p129, %p130
      %p132 = scmp.ne.s32.totalorder %s124, %s127
      %p133 = scmp.eq.s32.totalorder %s20, 0
      %p134 = por %p132, %p133
      %p135 = scmp.ne.s32.totalorder %s124, %s127
      %p136 = scmp.eq.s32.totalorder %s25, 1
      %p137 = por %p135, %p136
      %p138 = scmp.ne.s32.totalorder %s127, %s128
      %p139 = scmp.eq.s32.totalorder %s25, 0
      %p140 = por %p138, %p139
      %p141 = scmp.ne.s32.totalorder %s127, %s128
      %p142 = scmp.eq.s32.totalorder %s26, 1
      %p143 = por %p141, %p142
      %p145 = scmp.ne.s32.totalorder %s128, %s144
      %p146 = scmp.eq.s32.totalorder %s26, 0
      %p147 = por %p145, %p146
      %p148 = scmp.le.s32.totalorder 1, %s20
      %p149 = scmp.lt.s32.totalorder %s20, 3
      %p150 = pnand %p148, %p149
      %p151 = pneg %p150
      // Predicated region
      $region9: #{_lambda_.1} parent=5 // pred_check
        _
      $region10: #{_lambda_.1} parent=5 // pred_check_branch
        %153 = sbr.rel (%p150) target = $region12
      $region11: #{_lambda_.1} parent=5 // pred_region
        %s154 = ssub.s32 %s20, 1
        // Predicated region
        $region13: #{_lambda_.1} parent=11 // pred_check
          %p155 = pneg %p93
        $region14: #{_lambda_.1} parent=11 // pred_check_branch
          %157 = sbr.rel (%p155) target = $region16
        $region15: #{_lambda_.1} parent=11 // pred_region
          %159 = vsyncadd [#allocation6], 0
          %s160 = sshll.u32 %s2, 4
          %s161 = int_to_ptr.hbm [resolvable:$true] %s160
          %s162 = sshll.u32 [#allocation7], 4
          %s163 = int_to_ptr.vmem [resolvable:$true] %s162
          %168 = dma.hbm_to_vmem [thread:$0]  %s161, 2560, %s163, [#allocation6], 512, 512, 32
        $region16: #{_lambda_.1} parent=11 // pred_fallthru
          _
        // Predicated region
        $region17: #{_lambda_.1} parent=11 // pred_check
          %p169 = pneg %p114
        $region18: #{_lambda_.1} parent=11 // pred_check_branch
          %171 = sbr.rel (%p169) target = $region20
        $region19: #{_lambda_.1} parent=11 // pred_region
          %173 = vsyncadd [#allocation9], 0
          %s174 = sshll.u32 %s3, 4
          %s175 = int_to_ptr.hbm [resolvable:$true] %s174
          %s176 = sshll.u32 [#allocation8], 4
          %s177 = int_to_ptr.vmem [resolvable:$true] %s176
          %182 = dma.hbm_to_vmem [thread:$0]  %s175, 2560, %s177, [#allocation9], 512, 512, 32
        $region20: #{_lambda_.1} parent=11 // pred_fallthru
          _
      $region12: #{_lambda_.1} parent=5 // pred_fallthru
        _
      %p183 = scmp.lt.s32.totalorder %s20, 2
      // Predicated region
      $region21: #{_lambda_.1} parent=5 // pred_check
        %p184 = pneg %p183
      $region22: #{_lambda_.1} parent=5 // pred_check_branch
        %186 = sbr.rel (%p184) target = $region24
      $region23: #{_lambda_.1} parent=5 // pred_region
        // Predicated region
        $region25: #{_lambda_.1} parent=23 // pred_check
          %p187 = pneg %p40
        $region26: #{_lambda_.1} parent=23 // pred_check_branch
          %189 = sbr.rel (%p187) target = $region28
        $region27: #{_lambda_.1} parent=23 // pred_region
          %s190 = sand.u32 %s30, 1
          %s191 = scalar_lea.sflag [#allocation3], %s190
          %s192 = sand.u32 %s30, 1
          %s193 = smul.addr %s192, 2
          %s194 = scalar_lea.vmem [#allocation2], %s193
          %s195 = smul.u32 2, %s20
          %197 = vsyncadd %s191, 0
          %s198 = scalar_lea.hbm %s0, %s195
          %s200 = sshll.u32 %s198, 4
          %s201 = int_to_ptr.hbm [resolvable:$true] %s200
          %s202 = sshll.u32 %s194, 4
          %s203 = int_to_ptr.vmem [resolvable:$true] %s202
          %205 = dma.hbm_to_vmem [thread:$0]  %s201, 32, %s203, %s191
        $region28: #{_lambda_.1} parent=23 // pred_fallthru
          _
        // Predicated region
        $region29: #{_lambda_.1} parent=23 // pred_check
          %p206 = pneg %p66
        $region30: #{_lambda_.1} parent=23 // pred_check_branch
          %208 = sbr.rel (%p206) target = $region32
        $region31: #{_lambda_.1} parent=23 // pred_region
          %s209 = sand.u32 %s20, 1
          %s210 = scalar_lea.sflag [#allocation6], %s209
          %s211 = sand.u32 %s56, 1
          %s212 = smul.addr %s211, 2
          %s213 = scalar_lea.vmem [#allocation5], %s212
          %s214 = smul.u32 2, %s20
          %216 = vsyncadd %s210, 0
          %s217 = scalar_lea.hbm %s1, %s214
          %s219 = sshll.u32 %s217, 4
          %s220 = int_to_ptr.hbm [resolvable:$true] %s219
          %s221 = sshll.u32 %s213, 4
          %s222 = int_to_ptr.vmem [resolvable:$true] %s221
          %224 = dma.hbm_to_vmem [thread:$0]  %s220, 32, %s222, %s210
        $region32: #{_lambda_.1} parent=23 // pred_fallthru
          _
      $region24: #{_lambda_.1} parent=5 // pred_fallthru
        _
      %p225 = scmp.le.s32.totalorder 1, %s20
      %p226 = scmp.lt.s32.totalorder %s20, 3
      %p227 = pnand %p225, %p226
      %p228 = pneg %p227
      // Predicated region
      $region33: #{_lambda_.1} parent=5 // pred_check
        _
      $region34: #{_lambda_.1} parent=5 // pred_check_branch
        %230 = sbr.rel (%p227) target = $region36
      $region35: #{_lambda_.1} parent=5 // pred_region
        %s231 = ssub.s32 %s20, 1
        %s232 = sand.u32 %s33, 1
        %s233 = scalar_lea.sflag [#allocation3], %s232
        %s234 = sand.u32 %s33, 1
        %s235 = smul.addr %s234, 2
        %s236 = scalar_lea.vmem [#allocation2], %s235
        // Predicated region
        $region37: #{_lambda_.1} parent=35 // pred_check
          %p237 = pneg %p46
        $region38: #{_lambda_.1} parent=35 // pred_check_branch
          %239 = sbr.rel (%p237) target = $region40
        $region39: #{_lambda_.1} parent=35 // pred_region
          %241 = dma.done %s233, 32
        $region40: #{_lambda_.1} parent=35 // pred_fallthru
          _
        %s242 = sand.u32 %s25, 1
        %s243 = scalar_lea.sflag [#allocation6], %s242
        %s244 = sand.u32 %s59, 1
        %s245 = smul.addr %s244, 2
        %s246 = scalar_lea.vmem [#allocation5], %s245
        // Predicated region
        $region41: #{_lambda_.1} parent=35 // pred_check
          %p247 = pneg %p72
        $region42: #{_lambda_.1} parent=35 // pred_check_branch
          %249 = sbr.rel (%p247) target = $region44
        $region43: #{_lambda_.1} parent=35 // pred_region
          %251 = dma.done %s243, 32
        $region44: #{_lambda_.1} parent=35 // pred_fallthru
          _
        // Predicated region
        $region45: #{_lambda_.1} parent=35 // pred_check
          %p252 = pneg %p93
        $region46: #{_lambda_.1} parent=35 // pred_check_branch
          %254 = sbr.rel (%p252) target = $region48
        $region47: #{_lambda_.1} parent=35 // pred_region
          %256 = dma.done [#allocation6], 2560
        $region48: #{_lambda_.1} parent=35 // pred_fallthru
          _
        // Predicated region
        $region49: #{_lambda_.1} parent=35 // pred_check
          %p257 = pneg %p114
        $region50: #{_lambda_.1} parent=35 // pred_check_branch
          %259 = sbr.rel (%p257) target = $region52
        $region51: #{_lambda_.1} parent=35 // pred_region
          %261 = dma.done [#allocation9], 2560
        $region52: #{_lambda_.1} parent=35 // pred_fallthru
          _
        %s262 = sand.u32 %s33, 1
        %s263 = scalar_lea.sflag [#allocation3], %s262
        %s264 = sand.u32 %s33, 1
        %s265 = smul.addr %s264, 2
        %s266 = scalar_lea.vmem [#allocation2], %s265
        %p267 = pneg %p46
        %p268 = pneg %p43
        %s269 = sand.u32 %s25, 1
        %s270 = scalar_lea.sflag [#allocation6], %s269
        %s271 = sand.u32 %s59, 1
        %s272 = smul.addr %s271, 2
        %s273 = scalar_lea.vmem [#allocation5], %s272
        %p274 = pneg %p72
        %p275 = pneg %p69
        %p276 = pneg %p93
        %p277 = pneg %p90
        %p278 = pneg %p114
        %p279 = pneg %p111
        %p280 = pneg %p140
        %p281 = pneg %p137
        %s282 = sand.u32 %s127, 1
        %s283 = scalar_lea.sflag [#allocation4], %s282
        %s284 = sand.u32 %s127, 1
        %s285 = smul.addr %s284, 2
        %s286 = scalar_lea.vmem [#allocation10], %s285
        %s287 = smul.u32 2, %s25
        %s288 = smul.u32 2, %s25
        %s289 = smul.u32 2, %s25
        %v290 = vlaneseq
        %v291 = vshrl.u32 %v290, 7
        %v292 = vadd.s32 %v291, 8
        %v293 = vadd.s32 %v291, 16
        %v294 = vadd.s32 %v291, 24
        %v295 = vadd.s32 %v291, 32
        %v296 = vadd.s32 %v291, 40
        %v297 = vadd.s32 %v291, 48
        %v298 = vadd.s32 %v291, 56
        %v299 = vadd.s32 %v291, 64
        %v300 = vadd.s32 %v291, 72
        %v301 = vadd.s32 %v291, 80
        %v302 = vadd.s32 %v291, 88
        %v303 = vadd.s32 %v291, 96
        %v304 = vadd.s32 %v291, 104
        %v305 = vadd.s32 %v291, 112
        %v306 = vadd.s32 %v291, 120
        %v307 = vadd.s32 %v291, 128
        %v308 = vadd.s32 %v291, 136
        %v309 = vadd.s32 %v291, 144
        %v310 = vadd.s32 %v291, 152
        %v311 = vadd.s32 %v291, 160
        %v312 = vadd.s32 %v291, 168
        %v313 = vadd.s32 %v291, 176
        %v314 = vadd.s32 %v291, 184
        %v315 = vadd.s32 %v291, 192
        %v316 = vadd.s32 %v291, 200
        %v317 = vadd.s32 %v291, 208
        %v318 = vadd.s32 %v291, 216
        %v319 = vadd.s32 %v291, 224
        %v320 = vadd.s32 %v291, 232
        %v321 = vadd.s32 %v291, 240
        %v322 = vadd.s32 %v291, 248
        %v323 = vadd.s32 %v291, 256
        %v324 = vadd.s32 %v291, 264
        %v325 = vadd.s32 %v291, 272
        %v326 = vadd.s32 %v291, 280
        %v327 = vadd.s32 %v291, 288
        %v328 = vadd.s32 %v291, 296
        %v329 = vadd.s32 %v291, 304
        %v330 = vadd.s32 %v291, 312
        %v331 = vadd.s32 %v291, 320
        %v332 = vadd.s32 %v291, 328
        %v333 = vadd.s32 %v291, 336
        %v334 = vadd.s32 %v291, 344
        %v335 = vadd.s32 %v291, 352
        %v336 = vadd.s32 %v291, 360
        %v337 = vadd.s32 %v291, 368
        %v338 = vadd.s32 %v291, 376
        %v339 = vadd.s32 %v291, 384
        %v340 = vadd.s32 %v291, 392
        %v341 = vadd.s32 %v291, 400
        %v342 = vadd.s32 %v291, 408
        %v343 = vadd.s32 %v291, 416
        %v344 = vadd.s32 %v291, 424
        %v345 = vadd.s32 %v291, 432
        %v346 = vadd.s32 %v291, 440
        %v347 = vadd.s32 %v291, 448
        %v348 = vadd.s32 %v291, 456
        %v349 = vadd.s32 %v291, 464
        %v350 = vadd.s32 %v291, 472
        %v351 = vadd.s32 %v291, 480
        %v352 = vadd.s32 %v291, 488
        %v353 = vadd.s32 %v291, 496
        %v354 = vadd.s32 %v291, 504
        %v355 = vld [vmem:[%s236] sm:$0x3]
        %v356 = vperm.slane %v355, 0
        %v357 = vperm.slane %v355, 1
        %vm358 = vcmp.eq.s32.totalorder %v291, %v356
        %vm359 = vcmp.eq.s32.totalorder %v291, %v357
        %vm360 = vcmp.eq.s32.totalorder %v292, %v356
        %vm361 = vcmp.eq.s32.totalorder %v292, %v357
        %vm362 = vcmp.eq.s32.totalorder %v293, %v356
        %vm363 = vcmp.eq.s32.totalorder %v293, %v357
        %vm364 = vcmp.eq.s32.totalorder %v294, %v356
        %vm365 = vcmp.eq.s32.totalorder %v294, %v357
        %vm366 = vcmp.eq.s32.totalorder %v295, %v356
        %vm367 = vcmp.eq.s32.totalorder %v295, %v357
        %vm368 = vcmp.eq.s32.totalorder %v296, %v356
        %vm369 = vcmp.eq.s32.totalorder %v296, %v357
        %vm370 = vcmp.eq.s32.totalorder %v297, %v356
        %vm371 = vcmp.eq.s32.totalorder %v297, %v357
        %vm372 = vcmp.eq.s32.totalorder %v298, %v356
        %vm373 = vcmp.eq.s32.totalorder %v298, %v357
        %vm374 = vcmp.eq.s32.totalorder %v299, %v356
        %vm375 = vcmp.eq.s32.totalorder %v299, %v357
        %vm376 = vcmp.eq.s32.totalorder %v300, %v356
        %vm377 = vcmp.eq.s32.totalorder %v300, %v357
        %vm378 = vcmp.eq.s32.totalorder %v301, %v356
        %vm379 = vcmp.eq.s32.totalorder %v301, %v357
        %vm380 = vcmp.eq.s32.totalorder %v302, %v356
        %vm381 = vcmp.eq.s32.totalorder %v302, %v357
        %vm382 = vcmp.eq.s32.totalorder %v303, %v356
        %vm383 = vcmp.eq.s32.totalorder %v303, %v357
        %vm384 = vcmp.eq.s32.totalorder %v304, %v356
        %vm385 = vcmp.eq.s32.totalorder %v304, %v357
        %vm386 = vcmp.eq.s32.totalorder %v305, %v356
        %vm387 = vcmp.eq.s32.totalorder %v305, %v357
        %vm388 = vcmp.eq.s32.totalorder %v306, %v356
        %vm389 = vcmp.eq.s32.totalorder %v306, %v357
        %vm390 = vcmp.eq.s32.totalorder %v307, %v356
        %vm391 = vcmp.eq.s32.totalorder %v307, %v357
        %vm392 = vcmp.eq.s32.totalorder %v308, %v356
        %vm393 = vcmp.eq.s32.totalorder %v308, %v357
        %vm394 = vcmp.eq.s32.totalorder %v309, %v356
        %vm395 = vcmp.eq.s32.totalorder %v309, %v357
        %vm396 = vcmp.eq.s32.totalorder %v310, %v356
        %vm397 = vcmp.eq.s32.totalorder %v310, %v357
        %vm398 = vcmp.eq.s32.totalorder %v311, %v356
        %vm399 = vcmp.eq.s32.totalorder %v311, %v357
        %vm400 = vcmp.eq.s32.totalorder %v312, %v356
        %vm401 = vcmp.eq.s32.totalorder %v312, %v357
        %vm402 = vcmp.eq.s32.totalorder %v313, %v356
        %vm403 = vcmp.eq.s32.totalorder %v313, %v357
        %vm404 = vcmp.eq.s32.totalorder %v314, %v356
        %vm405 = vcmp.eq.s32.totalorder %v314, %v357
        %vm406 = vcmp.eq.s32.totalorder %v315, %v356
        %vm407 = vcmp.eq.s32.totalorder %v315, %v357
        %vm408 = vcmp.eq.s32.totalorder %v316, %v356
        %vm409 = vcmp.eq.s32.totalorder %v316, %v357
        %vm410 = vcmp.eq.s32.totalorder %v317, %v356
        %vm411 = vcmp.eq.s32.totalorder %v317, %v357
        %vm412 = vcmp.eq.s32.totalorder %v318, %v356
        %vm413 = vcmp.eq.s32.totalorder %v318, %v357
        %vm414 = vcmp.eq.s32.totalorder %v319, %v356
        %vm415 = vcmp.eq.s32.totalorder %v319, %v357
        %vm416 = vcmp.eq.s32.totalorder %v320, %v356
        %vm417 = vcmp.eq.s32.totalorder %v320, %v357
        %vm418 = vcmp.eq.s32.totalorder %v321, %v356
        %vm419 = vcmp.eq.s32.totalorder %v321, %v357
        %vm420 = vcmp.eq.s32.totalorder %v322, %v356
        %vm421 = vcmp.eq.s32.totalorder %v322, %v357
        %vm422 = vcmp.eq.s32.totalorder %v323, %v356
        %vm423 = vcmp.eq.s32.totalorder %v323, %v357
        %vm424 = vcmp.eq.s32.totalorder %v324, %v356
        %vm425 = vcmp.eq.s32.totalorder %v324, %v357
        %vm426 = vcmp.eq.s32.totalorder %v325, %v356
        %vm427 = vcmp.eq.s32.totalorder %v325, %v357
        %vm428 = vcmp.eq.s32.totalorder %v326, %v356
        %vm429 = vcmp.eq.s32.totalorder %v326, %v357
        %vm430 = vcmp.eq.s32.totalorder %v327, %v356
        %vm431 = vcmp.eq.s32.totalorder %v327, %v357
        %vm432 = vcmp.eq.s32.totalorder %v328, %v356
        %vm433 = vcmp.eq.s32.totalorder %v328, %v357
        %vm434 = vcmp.eq.s32.totalorder %v329, %v356
        %vm435 = vcmp.eq.s32.totalorder %v329, %v357
        %vm436 = vcmp.eq.s32.totalorder %v330, %v356
        %vm437 = vcmp.eq.s32.totalorder %v330, %v357
        %vm438 = vcmp.eq.s32.totalorder %v331, %v356
        %vm439 = vcmp.eq.s32.totalorder %v331, %v357
        %vm440 = vcmp.eq.s32.totalorder %v332, %v356
        %vm441 = vcmp.eq.s32.totalorder %v332, %v357
        %vm442 = vcmp.eq.s32.totalorder %v333, %v356
        %vm443 = vcmp.eq.s32.totalorder %v333, %v357
        %vm444 = vcmp.eq.s32.totalorder %v334, %v356
        %vm445 = vcmp.eq.s32.totalorder %v334, %v357
        %vm446 = vcmp.eq.s32.totalorder %v335, %v356
        %vm447 = vcmp.eq.s32.totalorder %v335, %v357
        %vm448 = vcmp.eq.s32.totalorder %v336, %v356
        %vm449 = vcmp.eq.s32.totalorder %v336, %v357
        %vm450 = vcmp.eq.s32.totalorder %v337, %v356
        %vm451 = vcmp.eq.s32.totalorder %v337, %v357
        %vm452 = vcmp.eq.s32.totalorder %v338, %v356
        %vm453 = vcmp.eq.s32.totalorder %v338, %v357
        %vm454 = vcmp.eq.s32.totalorder %v339, %v356
        %vm455 = vcmp.eq.s32.totalorder %v339, %v357
        %vm456 = vcmp.eq.s32.totalorder %v340, %v356
        %vm457 = vcmp.eq.s32.totalorder %v340, %v357
        %vm458 = vcmp.eq.s32.totalorder %v341, %v356
        %vm459 = vcmp.eq.s32.totalorder %v341, %v357
        %vm460 = vcmp.eq.s32.totalorder %v342, %v356
        %vm461 = vcmp.eq.s32.totalorder %v342, %v357
        %vm462 = vcmp.eq.s32.totalorder %v343, %v356
        %vm463 = vcmp.eq.s32.totalorder %v343, %v357
        %vm464 = vcmp.eq.s32.totalorder %v344, %v356
        %vm465 = vcmp.eq.s32.totalorder %v344, %v357
        %vm466 = vcmp.eq.s32.totalorder %v345, %v356
        %vm467 = vcmp.eq.s32.totalorder %v345, %v357
        %vm468 = vcmp.eq.s32.totalorder %v346, %v356
        %vm469 = vcmp.eq.s32.totalorder %v346, %v357
        %vm470 = vcmp.eq.s32.totalorder %v347, %v356
        %vm471 = vcmp.eq.s32.totalorder %v347, %v357
        %vm472 = vcmp.eq.s32.totalorder %v348, %v356
        %vm473 = vcmp.eq.s32.totalorder %v348, %v357
        %vm474 = vcmp.eq.s32.totalorder %v349, %v356
        %vm475 = vcmp.eq.s32.totalorder %v349, %v357
        %vm476 = vcmp.eq.s32.totalorder %v350, %v356
        %vm477 = vcmp.eq.s32.totalorder %v350, %v357
        %vm478 = vcmp.eq.s32.totalorder %v351, %v356
        %vm479 = vcmp.eq.s32.totalorder %v351, %v357
        %vm480 = vcmp.eq.s32.totalorder %v352, %v356
        %vm481 = vcmp.eq.s32.totalorder %v352, %v357
        %vm482 = vcmp.eq.s32.totalorder %v353, %v356
        %vm483 = vcmp.eq.s32.totalorder %v353, %v357
        %vm484 = vcmp.eq.s32.totalorder %v354, %v356
        %vm485 = vcmp.eq.s32.totalorder %v354, %v357
        %v486 = vsel %vm358, 1, 0
        %v487 = vsel %vm359, 1, 0
        %v488 = vsel %vm360, 1, 0
        %v489 = vsel %vm361, 1, 0
        %v490 = vsel %vm362, 1, 0
        %v491 = vsel %vm363, 1, 0
        %v492 = vsel %vm364, 1, 0
        %v493 = vsel %vm365, 1, 0
        %v494 = vsel %vm366, 1, 0
        %v495 = vsel %vm367, 1, 0
        %v496 = vsel %vm368, 1, 0
        %v497 = vsel %vm369, 1, 0
        %v498 = vsel %vm370, 1, 0
        %v499 = vsel %vm371, 1, 0
        %v500 = vsel %vm372, 1, 0
        %v501 = vsel %vm373, 1, 0
        %v502 = vsel %vm374, 1, 0
        %v503 = vsel %vm375, 1, 0
        %v504 = vsel %vm376, 1, 0
        %v505 = vsel %vm377, 1, 0
        %v506 = vsel %vm378, 1, 0
        %v507 = vsel %vm379, 1, 0
        %v508 = vsel %vm380, 1, 0
        %v509 = vsel %vm381, 1, 0
        %v510 = vsel %vm382, 1, 0
        %v511 = vsel %vm383, 1, 0
        %v512 = vsel %vm384, 1, 0
        %v513 = vsel %vm385, 1, 0
        %v514 = vsel %vm386, 1, 0
        %v515 = vsel %vm387, 1, 0
        %v516 = vsel %vm388, 1, 0
        %v517 = vsel %vm389, 1, 0
        %v518 = vsel %vm390, 1, 0
        %v519 = vsel %vm391, 1, 0
        %v520 = vsel %vm392, 1, 0
        %v521 = vsel %vm393, 1, 0
        %v522 = vsel %vm394, 1, 0
        %v523 = vsel %vm395, 1, 0
        %v524 = vsel %vm396, 1, 0
        %v525 = vsel %vm397, 1, 0
        %v526 = vsel %vm398, 1, 0
        %v527 = vsel %vm399, 1, 0
        %v528 = vsel %vm400, 1, 0
        %v529 = vsel %vm401, 1, 0
        %v530 = vsel %vm402, 1, 0
        %v531 = vsel %vm403, 1, 0
        %v532 = vsel %vm404, 1, 0
        %v533 = vsel %vm405, 1, 0
        %v534 = vsel %vm406, 1, 0
        %v535 = vsel %vm407, 1, 0
        %v536 = vsel %vm408, 1, 0
        %v537 = vsel %vm409, 1, 0
        %v538 = vsel %vm410, 1, 0
        %v539 = vsel %vm411, 1, 0
        %v540 = vsel %vm412, 1, 0
        %v541 = vsel %vm413, 1, 0
        %v542 = vsel %vm414, 1, 0
        %v543 = vsel %vm415, 1, 0
        %v544 = vsel %vm416, 1, 0
        %v545 = vsel %vm417, 1, 0
        %v546 = vsel %vm418, 1, 0
        %v547 = vsel %vm419, 1, 0
        %v548 = vsel %vm420, 1, 0
        %v549 = vsel %vm421, 1, 0
        %v550 = vsel %vm422, 1, 0
        %v551 = vsel %vm423, 1, 0
        %v552 = vsel %vm424, 1, 0
        %v553 = vsel %vm425, 1, 0
        %v554 = vsel %vm426, 1, 0
        %v555 = vsel %vm427, 1, 0
        %v556 = vsel %vm428, 1, 0
        %v557 = vsel %vm429, 1, 0
        %v558 = vsel %vm430, 1, 0
        %v559 = vsel %vm431, 1, 0
        %v560 = vsel %vm432, 1, 0
        %v561 = vsel %vm433, 1, 0
        %v562 = vsel %vm434, 1, 0
        %v563 = vsel %vm435, 1, 0
        %v564 = vsel %vm436, 1, 0
        %v565 = vsel %vm437, 1, 0
        %v566 = vsel %vm438, 1, 0
        %v567 = vsel %vm439, 1, 0
        %v568 = vsel %vm440, 1, 0
        %v569 = vsel %vm441, 1, 0
        %v570 = vsel %vm442, 1, 0
        %v571 = vsel %vm443, 1, 0
        %v572 = vsel %vm444, 1, 0
        %v573 = vsel %vm445, 1, 0
        %v574 = vsel %vm446, 1, 0
        %v575 = vsel %vm447, 1, 0
        %v576 = vsel %vm448, 1, 0
        %v577 = vsel %vm449, 1, 0
        %v578 = vsel %vm450, 1, 0
        %v579 = vsel %vm451, 1, 0
        %v580 = vsel %vm452, 1, 0
        %v581 = vsel %vm453, 1, 0
        %v582 = vsel %vm454, 1, 0
        %v583 = vsel %vm455, 1, 0
        %v584 = vsel %vm456, 1, 0
        %v585 = vsel %vm457, 1, 0
        %v586 = vsel %vm458, 1, 0
        %v587 = vsel %vm459, 1, 0
        %v588 = vsel %vm460, 1, 0
        %v589 = vsel %vm461, 1, 0
        %v590 = vsel %vm462, 1, 0
        %v591 = vsel %vm463, 1, 0
        %v592 = vsel %vm464, 1, 0
        %v593 = vsel %vm465, 1, 0
        %v594 = vsel %vm466, 1, 0
        %v595 = vsel %vm467, 1, 0
        %v596 = vsel %vm468, 1, 0
        %v597 = vsel %vm469, 1, 0
        %v598 = vsel %vm470, 1, 0
        %v599 = vsel %vm471, 1, 0
        %v600 = vsel %vm472, 1, 0
        %v601 = vsel %vm473, 1, 0
        %v602 = vsel %vm474, 1, 0
        %v603 = vsel %vm475, 1, 0
        %v604 = vsel %vm476, 1, 0
        %v605 = vsel %vm477, 1, 0
        %v606 = vsel %vm478, 1, 0
        %v607 = vsel %vm479, 1, 0
        %v608 = vsel %vm480, 1, 0
        %v609 = vsel %vm481, 1, 0
        %v610 = vsel %vm482, 1, 0
        %v611 = vsel %vm483, 1, 0
        %v612 = vsel %vm484, 1, 0
        %v613 = vsel %vm485, 1, 0
        %v614 = vcvt.s32.f32 %v486
        %v615 = vcvt.s32.f32 %v487
        %v616 = vcvt.s32.f32 %v488
        %v617 = vcvt.s32.f32 %v489
        %v618 = vcvt.s32.f32 %v490
        %v619 = vcvt.s32.f32 %v491
        %v620 = vcvt.s32.f32 %v492
        %v621 = vcvt.s32.f32 %v493
        %v622 = vcvt.s32.f32 %v494
        %v623 = vcvt.s32.f32 %v495
        %v624 = vcvt.s32.f32 %v496
        %v625 = vcvt.s32.f32 %v497
        %v626 = vcvt.s32.f32 %v498
        %v627 = vcvt.s32.f32 %v499
        %v628 = vcvt.s32.f32 %v500
        %v629 = vcvt.s32.f32 %v501
        %v630 = vcvt.s32.f32 %v502
        %v631 = vcvt.s32.f32 %v503
        %v632 = vcvt.s32.f32 %v504
        %v633 = vcvt.s32.f32 %v505
        %v634 = vcvt.s32.f32 %v506
        %v635 = vcvt.s32.f32 %v507
        %v636 = vcvt.s32.f32 %v508
        %v637 = vcvt.s32.f32 %v509
        %v638 = vcvt.s32.f32 %v510
        %v639 = vcvt.s32.f32 %v511
        %v640 = vcvt.s32.f32 %v512
        %v641 = vcvt.s32.f32 %v513
        %v642 = vcvt.s32.f32 %v514
        %v643 = vcvt.s32.f32 %v515
        %v644 = vcvt.s32.f32 %v516
        %v645 = vcvt.s32.f32 %v517
        %v646 = vcvt.s32.f32 %v518
        %v647 = vcvt.s32.f32 %v519
        %v648 = vcvt.s32.f32 %v520
        %v649 = vcvt.s32.f32 %v521
        %v650 = vcvt.s32.f32 %v522
        %v651 = vcvt.s32.f32 %v523
        %v652 = vcvt.s32.f32 %v524
        %v653 = vcvt.s32.f32 %v525
        %v654 = vcvt.s32.f32 %v526
        %v655 = vcvt.s32.f32 %v527
        %v656 = vcvt.s32.f32 %v528
        %v657 = vcvt.s32.f32 %v529
        %v658 = vcvt.s32.f32 %v530
        %v659 = vcvt.s32.f32 %v531
        %v660 = vcvt.s32.f32 %v532
        %v661 = vcvt.s32.f32 %v533
        %v662 = vcvt.s32.f32 %v534
        %v663 = vcvt.s32.f32 %v535
        %v664 = vcvt.s32.f32 %v536
        %v665 = vcvt.s32.f32 %v537
        %v666 = vcvt.s32.f32 %v538
        %v667 = vcvt.s32.f32 %v539
        %v668 = vcvt.s32.f32 %v540
        %v669 = vcvt.s32.f32 %v541
        %v670 = vcvt.s32.f32 %v542
        %v671 = vcvt.s32.f32 %v543
        %v672 = vcvt.s32.f32 %v544
        %v673 = vcvt.s32.f32 %v545
        %v674 = vcvt.s32.f32 %v546
        %v675 = vcvt.s32.f32 %v547
        %v676 = vcvt.s32.f32 %v548
        %v677 = vcvt.s32.f32 %v549
        %v678 = vcvt.s32.f32 %v550
        %v679 = vcvt.s32.f32 %v551
        %v680 = vcvt.s32.f32 %v552
        %v681 = vcvt.s32.f32 %v553
        %v682 = vcvt.s32.f32 %v554
        %v683 = vcvt.s32.f32 %v555
        %v684 = vcvt.s32.f32 %v556
        %v685 = vcvt.s32.f32 %v557
        %v686 = vcvt.s32.f32 %v558
        %v687 = vcvt.s32.f32 %v559
        %v688 = vcvt.s32.f32 %v560
        %v689 = vcvt.s32.f32 %v561
        %v690 = vcvt.s32.f32 %v562
        %v691 = vcvt.s32.f32 %v563
        %v692 = vcvt.s32.f32 %v564
        %v693 = vcvt.s32.f32 %v565
        %v694 = vcvt.s32.f32 %v566
        %v695 = vcvt.s32.f32 %v567
        %v696 = vcvt.s32.f32 %v568
        %v697 = vcvt.s32.f32 %v569
        %v698 = vcvt.s32.f32 %v570
        %v699 = vcvt.s32.f32 %v571
        %v700 = vcvt.s32.f32 %v572
        %v701 = vcvt.s32.f32 %v573
        %v702 = vcvt.s32.f32 %v574
        %v703 = vcvt.s32.f32 %v575
        %v704 = vcvt.s32.f32 %v576
        %v705 = vcvt.s32.f32 %v577
        %v706 = vcvt.s32.f32 %v578
        %v707 = vcvt.s32.f32 %v579
        %v708 = vcvt.s32.f32 %v580
        %v709 = vcvt.s32.f32 %v581
        %v710 = vcvt.s32.f32 %v582
        %v711 = vcvt.s32.f32 %v583
        %v712 = vcvt.s32.f32 %v584
        %v713 = vcvt.s32.f32 %v585
        %v714 = vcvt.s32.f32 %v586
        %v715 = vcvt.s32.f32 %v587
        %v716 = vcvt.s32.f32 %v588
        %v717 = vcvt.s32.f32 %v589
        %v718 = vcvt.s32.f32 %v590
        %v719 = vcvt.s32.f32 %v591
        %v720 = vcvt.s32.f32 %v592
        %v721 = vcvt.s32.f32 %v593
        %v722 = vcvt.s32.f32 %v594
        %v723 = vcvt.s32.f32 %v595
        %v724 = vcvt.s32.f32 %v596
        %v725 = vcvt.s32.f32 %v597
        %v726 = vcvt.s32.f32 %v598
        %v727 = vcvt.s32.f32 %v599
        %v728 = vcvt.s32.f32 %v600
        %v729 = vcvt.s32.f32 %v601
        %v730 = vcvt.s32.f32 %v602
        %v731 = vcvt.s32.f32 %v603
        %v732 = vcvt.s32.f32 %v604
        %v733 = vcvt.s32.f32 %v605
        %v734 = vcvt.s32.f32 %v606
        %v735 = vcvt.s32.f32 %v607
        %v736 = vcvt.s32.f32 %v608
        %v737 = vcvt.s32.f32 %v609
        %v738 = vcvt.s32.f32 %v610
        %v739 = vcvt.s32.f32 %v611
        %v740 = vcvt.s32.f32 %v612
        %v741 = vcvt.s32.f32 %v613
        %v742 = vld [vmem:[%s246] sm:$0x3]
        %v743 = vperm.slane %v742, 0
        %v744 = vperm.slane %v742, 1
        %vm745 = vcmp.eq.s32.totalorder %v291, %v743
        %vm746 = vcmp.eq.s32.totalorder %v291, %v744
        %vm747 = vcmp.eq.s32.totalorder %v292, %v743
        %vm748 = vcmp.eq.s32.totalorder %v292, %v744
        %vm749 = vcmp.eq.s32.totalorder %v293, %v743
        %vm750 = vcmp.eq.s32.totalorder %v293, %v744
        %vm751 = vcmp.eq.s32.totalorder %v294, %v743
        %vm752 = vcmp.eq.s32.totalorder %v294, %v744
        %vm753 = vcmp.eq.s32.totalorder %v295, %v743
        %vm754 = vcmp.eq.s32.totalorder %v295, %v744
        %vm755 = vcmp.eq.s32.totalorder %v296, %v743
        %vm756 = vcmp.eq.s32.totalorder %v296, %v744
        %vm757 = vcmp.eq.s32.totalorder %v297, %v743
        %vm758 = vcmp.eq.s32.totalorder %v297, %v744
        %vm759 = vcmp.eq.s32.totalorder %v298, %v743
        %vm760 = vcmp.eq.s32.totalorder %v298, %v744
        %vm761 = vcmp.eq.s32.totalorder %v299, %v743
        %vm762 = vcmp.eq.s32.totalorder %v299, %v744
        %vm763 = vcmp.eq.s32.totalorder %v300, %v743
        %vm764 = vcmp.eq.s32.totalorder %v300, %v744
        %vm765 = vcmp.eq.s32.totalorder %v301, %v743
        %vm766 = vcmp.eq.s32.totalorder %v301, %v744
        %vm767 = vcmp.eq.s32.totalorder %v302, %v743
        %vm768 = vcmp.eq.s32.totalorder %v302, %v744
        %vm769 = vcmp.eq.s32.totalorder %v303, %v743
        %vm770 = vcmp.eq.s32.totalorder %v303, %v744
        %vm771 = vcmp.eq.s32.totalorder %v304, %v743
        %vm772 = vcmp.eq.s32.totalorder %v304, %v744
        %vm773 = vcmp.eq.s32.totalorder %v305, %v743
        %vm774 = vcmp.eq.s32.totalorder %v305, %v744
        %vm775 = vcmp.eq.s32.totalorder %v306, %v743
        %vm776 = vcmp.eq.s32.totalorder %v306, %v744
        %vm777 = vcmp.eq.s32.totalorder %v307, %v743
        %vm778 = vcmp.eq.s32.totalorder %v307, %v744
        %vm779 = vcmp.eq.s32.totalorder %v308, %v743
        %vm780 = vcmp.eq.s32.totalorder %v308, %v744
        %vm781 = vcmp.eq.s32.totalorder %v309, %v743
        %vm782 = vcmp.eq.s32.totalorder %v309, %v744
        %vm783 = vcmp.eq.s32.totalorder %v310, %v743
        %vm784 = vcmp.eq.s32.totalorder %v310, %v744
        %vm785 = vcmp.eq.s32.totalorder %v311, %v743
        %vm786 = vcmp.eq.s32.totalorder %v311, %v744
        %vm787 = vcmp.eq.s32.totalorder %v312, %v743
        %vm788 = vcmp.eq.s32.totalorder %v312, %v744
        %vm789 = vcmp.eq.s32.totalorder %v313, %v743
        %vm790 = vcmp.eq.s32.totalorder %v313, %v744
        %vm791 = vcmp.eq.s32.totalorder %v314, %v743
        %vm792 = vcmp.eq.s32.totalorder %v314, %v744
        %vm793 = vcmp.eq.s32.totalorder %v315, %v743
        %vm794 = vcmp.eq.s32.totalorder %v315, %v744
        %vm795 = vcmp.eq.s32.totalorder %v316, %v743
        %vm796 = vcmp.eq.s32.totalorder %v316, %v744
        %vm797 = vcmp.eq.s32.totalorder %v317, %v743
        %vm798 = vcmp.eq.s32.totalorder %v317, %v744
        %vm799 = vcmp.eq.s32.totalorder %v318, %v743
        %vm800 = vcmp.eq.s32.totalorder %v318, %v744
        %vm801 = vcmp.eq.s32.totalorder %v319, %v743
        %vm802 = vcmp.eq.s32.totalorder %v319, %v744
        %vm803 = vcmp.eq.s32.totalorder %v320, %v743
        %vm804 = vcmp.eq.s32.totalorder %v320, %v744
        %vm805 = vcmp.eq.s32.totalorder %v321, %v743
        %vm806 = vcmp.eq.s32.totalorder %v321, %v744
        %vm807 = vcmp.eq.s32.totalorder %v322, %v743
        %vm808 = vcmp.eq.s32.totalorder %v322, %v744
        %vm809 = vcmp.eq.s32.totalorder %v323, %v743
        %vm810 = vcmp.eq.s32.totalorder %v323, %v744
        %vm811 = vcmp.eq.s32.totalorder %v324, %v743
        %vm812 = vcmp.eq.s32.totalorder %v324, %v744
        %vm813 = vcmp.eq.s32.totalorder %v325, %v743
        %vm814 = vcmp.eq.s32.totalorder %v325, %v744
        %vm815 = vcmp.eq.s32.totalorder %v326, %v743
        %vm816 = vcmp.eq.s32.totalorder %v326, %v744
        %vm817 = vcmp.eq.s32.totalorder %v327, %v743
        %vm818 = vcmp.eq.s32.totalorder %v327, %v744
        %vm819 = vcmp.eq.s32.totalorder %v328, %v743
        %vm820 = vcmp.eq.s32.totalorder %v328, %v744
        %vm821 = vcmp.eq.s32.totalorder %v329, %v743
        %vm822 = vcmp.eq.s32.totalorder %v329, %v744
        %vm823 = vcmp.eq.s32.totalorder %v330, %v743
        %vm824 = vcmp.eq.s32.totalorder %v330, %v744
        %vm825 = vcmp.eq.s32.totalorder %v331, %v743
        %vm826 = vcmp.eq.s32.totalorder %v331, %v744
        %vm827 = vcmp.eq.s32.totalorder %v332, %v743
        %vm828 = vcmp.eq.s32.totalorder %v332, %v744
        %vm829 = vcmp.eq.s32.totalorder %v333, %v743
        %vm830 = vcmp.eq.s32.totalorder %v333, %v744
        %vm831 = vcmp.eq.s32.totalorder %v334, %v743
        %vm832 = vcmp.eq.s32.totalorder %v334, %v744
        %vm833 = vcmp.eq.s32.totalorder %v335, %v743
        %vm834 = vcmp.eq.s32.totalorder %v335, %v744
        %vm835 = vcmp.eq.s32.totalorder %v336, %v743
        %vm836 = vcmp.eq.s32.totalorder %v336, %v744
        %vm837 = vcmp.eq.s32.totalorder %v337, %v743
        %vm838 = vcmp.eq.s32.totalorder %v337, %v744
        %vm839 = vcmp.eq.s32.totalorder %v338, %v743
        %vm840 = vcmp.eq.s32.totalorder %v338, %v744
        %vm841 = vcmp.eq.s32.totalorder %v339, %v743
        %vm842 = vcmp.eq.s32.totalorder %v339, %v744
        %vm843 = vcmp.eq.s32.totalorder %v340, %v743
        %vm844 = vcmp.eq.s32.totalorder %v340, %v744
        %vm845 = vcmp.eq.s32.totalorder %v341, %v743
        %vm846 = vcmp.eq.s32.totalorder %v341, %v744
        %vm847 = vcmp.eq.s32.totalorder %v342, %v743
        %vm848 = vcmp.eq.s32.totalorder %v342, %v744
        %vm849 = vcmp.eq.s32.totalorder %v343, %v743
        %vm850 = vcmp.eq.s32.totalorder %v343, %v744
        %vm851 = vcmp.eq.s32.totalorder %v344, %v743
        %vm852 = vcmp.eq.s32.totalorder %v344, %v744
        %vm853 = vcmp.eq.s32.totalorder %v345, %v743
        %vm854 = vcmp.eq.s32.totalorder %v345, %v744
        %vm855 = vcmp.eq.s32.totalorder %v346, %v743
        %vm856 = vcmp.eq.s32.totalorder %v346, %v744
        %vm857 = vcmp.eq.s32.totalorder %v347, %v743
        %vm858 = vcmp.eq.s32.totalorder %v347, %v744
        %vm859 = vcmp.eq.s32.totalorder %v348, %v743
        %vm860 = vcmp.eq.s32.totalorder %v348, %v744
        %vm861 = vcmp.eq.s32.totalorder %v349, %v743
        %vm862 = vcmp.eq.s32.totalorder %v349, %v744
        %vm863 = vcmp.eq.s32.totalorder %v350, %v743
        %vm864 = vcmp.eq.s32.totalorder %v350, %v744
        %vm865 = vcmp.eq.s32.totalorder %v351, %v743
        %vm866 = vcmp.eq.s32.totalorder %v351, %v744
        %vm867 = vcmp.eq.s32.totalorder %v352, %v743
        %vm868 = vcmp.eq.s32.totalorder %v352, %v744
        %vm869 = vcmp.eq.s32.totalorder %v353, %v743
        %vm870 = vcmp.eq.s32.totalorder %v353, %v744
        %vm871 = vcmp.eq.s32.totalorder %v354, %v743
        %vm872 = vcmp.eq.s32.totalorder %v354, %v744
        %v873 = vsel %vm745, 1, 0
        %v874 = vsel %vm746, 1, 0
        %v875 = vsel %vm747, 1, 0
        %v876 = vsel %vm748, 1, 0
        %v877 = vsel %vm749, 1, 0
        %v878 = vsel %vm750, 1, 0
        %v879 = vsel %vm751, 1, 0
        %v880 = vsel %vm752, 1, 0
        %v881 = vsel %vm753, 1, 0
        %v882 = vsel %vm754, 1, 0
        %v883 = vsel %vm755, 1, 0
        %v884 = vsel %vm756, 1, 0
        %v885 = vsel %vm757, 1, 0
        %v886 = vsel %vm758, 1, 0
        %v887 = vsel %vm759, 1, 0
        %v888 = vsel %vm760, 1, 0
        %v889 = vsel %vm761, 1, 0
        %v890 = vsel %vm762, 1, 0
        %v891 = vsel %vm763, 1, 0
        %v892 = vsel %vm764, 1, 0
        %v893 = vsel %vm765, 1, 0
        %v894 = vsel %vm766, 1, 0
        %v895 = vsel %vm767, 1, 0
        %v896 = vsel %vm768, 1, 0
        %v897 = vsel %vm769, 1, 0
        %v898 = vsel %vm770, 1, 0
        %v899 = vsel %vm771, 1, 0
        %v900 = vsel %vm772, 1, 0
        %v901 = vsel %vm773, 1, 0
        %v902 = vsel %vm774, 1, 0
        %v903 = vsel %vm775, 1, 0
        %v904 = vsel %vm776, 1, 0
        %v905 = vsel %vm777, 1, 0
        %v906 = vsel %vm778, 1, 0
        %v907 = vsel %vm779, 1, 0
        %v908 = vsel %vm780, 1, 0
        %v909 = vsel %vm781, 1, 0
        %v910 = vsel %vm782, 1, 0
        %v911 = vsel %vm783, 1, 0
        %v912 = vsel %vm784, 1, 0
        %v913 = vsel %vm785, 1, 0
        %v914 = vsel %vm786, 1, 0
        %v915 = vsel %vm787, 1, 0
        %v916 = vsel %vm788, 1, 0
        %v917 = vsel %vm789, 1, 0
        %v918 = vsel %vm790, 1, 0
        %v919 = vsel %vm791, 1, 0
        %v920 = vsel %vm792, 1, 0
        %v921 = vsel %vm793, 1, 0
        %v922 = vsel %vm794, 1, 0
        %v923 = vsel %vm795, 1, 0
        %v924 = vsel %vm796, 1, 0
        %v925 = vsel %vm797, 1, 0
        %v926 = vsel %vm798, 1, 0
        %v927 = vsel %vm799, 1, 0
        %v928 = vsel %vm800, 1, 0
        %v929 = vsel %vm801, 1, 0
        %v930 = vsel %vm802, 1, 0
        %v931 = vsel %vm803, 1, 0
        %v932 = vsel %vm804, 1, 0
        %v933 = vsel %vm805, 1, 0
        %v934 = vsel %vm806, 1, 0
        %v935 = vsel %vm807, 1, 0
        %v936 = vsel %vm808, 1, 0
        %v937 = vsel %vm809, 1, 0
        %v938 = vsel %vm810, 1, 0
        %v939 = vsel %vm811, 1, 0
        %v940 = vsel %vm812, 1, 0
        %v941 = vsel %vm813, 1, 0
        %v942 = vsel %vm814, 1, 0
        %v943 = vsel %vm815, 1, 0
        %v944 = vsel %vm816, 1, 0
        %v945 = vsel %vm817, 1, 0
        %v946 = vsel %vm818, 1, 0
        %v947 = vsel %vm819, 1, 0
        %v948 = vsel %vm820, 1, 0
        %v949 = vsel %vm821, 1, 0
        %v950 = vsel %vm822, 1, 0
        %v951 = vsel %vm823, 1, 0
        %v952 = vsel %vm824, 1, 0
        %v953 = vsel %vm825, 1, 0
        %v954 = vsel %vm826, 1, 0
        %v955 = vsel %vm827, 1, 0
        %v956 = vsel %vm828, 1, 0
        %v957 = vsel %vm829, 1, 0
        %v958 = vsel %vm830, 1, 0
        %v959 = vsel %vm831, 1, 0
        %v960 = vsel %vm832, 1, 0
        %v961 = vsel %vm833, 1, 0
        %v962 = vsel %vm834, 1, 0
        %v963 = vsel %vm835, 1, 0
        %v964 = vsel %vm836, 1, 0
        %v965 = vsel %vm837, 1, 0
        %v966 = vsel %vm838, 1, 0
        %v967 = vsel %vm839, 1, 0
        %v968 = vsel %vm840, 1, 0
        %v969 = vsel %vm841, 1, 0
        %v970 = vsel %vm842, 1, 0
        %v971 = vsel %vm843, 1, 0
        %v972 = vsel %vm844, 1, 0
        %v973 = vsel %vm845, 1, 0
        %v974 = vsel %vm846, 1, 0
        %v975 = vsel %vm847, 1, 0
        %v976 = vsel %vm848, 1, 0
        %v977 = vsel %vm849, 1, 0
        %v978 = vsel %vm850, 1, 0
        %v979 = vsel %vm851, 1, 0
        %v980 = vsel %vm852, 1, 0
        %v981 = vsel %vm853, 1, 0
        %v982 = vsel %vm854, 1, 0
        %v983 = vsel %vm855, 1, 0
        %v984 = vsel %vm856, 1, 0
        %v985 = vsel %vm857, 1, 0
        %v986 = vsel %vm858, 1, 0
        %v987 = vsel %vm859, 1, 0
        %v988 = vsel %vm860, 1, 0
        %v989 = vsel %vm861, 1, 0
        %v990 = vsel %vm862, 1, 0
        %v991 = vsel %vm863, 1, 0
        %v992 = vsel %vm864, 1, 0
        %v993 = vsel %vm865, 1, 0
        %v994 = vsel %vm866, 1, 0
        %v995 = vsel %vm867, 1, 0
        %v996 = vsel %vm868, 1, 0
        %v997 = vsel %vm869, 1, 0
        %v998 = vsel %vm870, 1, 0
        %v999 = vsel %vm871, 1, 0
        %v1000 = vsel %vm872, 1, 0
        %v1001 = vcvt.s32.f32 %v873
        %v1002 = vcvt.s32.f32 %v874
        %v1003 = vcvt.s32.f32 %v875
        %v1004 = vcvt.s32.f32 %v876
        %v1005 = vcvt.s32.f32 %v877
        %v1006 = vcvt.s32.f32 %v878
        %v1007 = vcvt.s32.f32 %v879
        %v1008 = vcvt.s32.f32 %v880
        %v1009 = vcvt.s32.f32 %v881
        %v1010 = vcvt.s32.f32 %v882
        %v1011 = vcvt.s32.f32 %v883
        %v1012 = vcvt.s32.f32 %v884
        %v1013 = vcvt.s32.f32 %v885
        %v1014 = vcvt.s32.f32 %v886
        %v1015 = vcvt.s32.f32 %v887
        %v1016 = vcvt.s32.f32 %v888
        %v1017 = vcvt.s32.f32 %v889
        %v1018 = vcvt.s32.f32 %v890
        %v1019 = vcvt.s32.f32 %v891
        %v1020 = vcvt.s32.f32 %v892
        %v1021 = vcvt.s32.f32 %v893
        %v1022 = vcvt.s32.f32 %v894
        %v1023 = vcvt.s32.f32 %v895
        %v1024 = vcvt.s32.f32 %v896
        %v1025 = vcvt.s32.f32 %v897
        %v1026 = vcvt.s32.f32 %v898
        %v1027 = vcvt.s32.f32 %v899
        %v1028 = vcvt.s32.f32 %v900
        %v1029 = vcvt.s32.f32 %v901
        %v1030 = vcvt.s32.f32 %v902
        %v1031 = vcvt.s32.f32 %v903
        %v1032 = vcvt.s32.f32 %v904
        %v1033 = vcvt.s32.f32 %v905
        %v1034 = vcvt.s32.f32 %v906
        %v1035 = vcvt.s32.f32 %v907
        %v1036 = vcvt.s32.f32 %v908
        %v1037 = vcvt.s32.f32 %v909
        %v1038 = vcvt.s32.f32 %v910
        %v1039 = vcvt.s32.f32 %v911
        %v1040 = vcvt.s32.f32 %v912
        %v1041 = vcvt.s32.f32 %v913
        %v1042 = vcvt.s32.f32 %v914
        %v1043 = vcvt.s32.f32 %v915
        %v1044 = vcvt.s32.f32 %v916
        %v1045 = vcvt.s32.f32 %v917
        %v1046 = vcvt.s32.f32 %v918
        %v1047 = vcvt.s32.f32 %v919
        %v1048 = vcvt.s32.f32 %v920
        %v1049 = vcvt.s32.f32 %v921
        %v1050 = vcvt.s32.f32 %v922
        %v1051 = vcvt.s32.f32 %v923
        %v1052 = vcvt.s32.f32 %v924
        %v1053 = vcvt.s32.f32 %v925
        %v1054 = vcvt.s32.f32 %v926
        %v1055 = vcvt.s32.f32 %v927
        %v1056 = vcvt.s32.f32 %v928
        %v1057 = vcvt.s32.f32 %v929
        %v1058 = vcvt.s32.f32 %v930
        %v1059 = vcvt.s32.f32 %v931
        %v1060 = vcvt.s32.f32 %v932
        %v1061 = vcvt.s32.f32 %v933
        %v1062 = vcvt.s32.f32 %v934
        %v1063 = vcvt.s32.f32 %v935
        %v1064 = vcvt.s32.f32 %v936
        %v1065 = vcvt.s32.f32 %v937
        %v1066 = vcvt.s32.f32 %v938
        %v1067 = vcvt.s32.f32 %v939
        %v1068 = vcvt.s32.f32 %v940
        %v1069 = vcvt.s32.f32 %v941
        %v1070 = vcvt.s32.f32 %v942
        %v1071 = vcvt.s32.f32 %v943
        %v1072 = vcvt.s32.f32 %v944
        %v1073 = vcvt.s32.f32 %v945
        %v1074 = vcvt.s32.f32 %v946
        %v1075 = vcvt.s32.f32 %v947
        %v1076 = vcvt.s32.f32 %v948
        %v1077 = vcvt.s32.f32 %v949
        %v1078 = vcvt.s32.f32 %v950
        %v1079 = vcvt.s32.f32 %v951
        %v1080 = vcvt.s32.f32 %v952
        %v1081 = vcvt.s32.f32 %v953
        %v1082 = vcvt.s32.f32 %v954
        %v1083 = vcvt.s32.f32 %v955
        %v1084 = vcvt.s32.f32 %v956
        %v1085 = vcvt.s32.f32 %v957
        %v1086 = vcvt.s32.f32 %v958
        %v1087 = vcvt.s32.f32 %v959
        %v1088 = vcvt.s32.f32 %v960
        %v1089 = vcvt.s32.f32 %v961
        %v1090 = vcvt.s32.f32 %v962
        %v1091 = vcvt.s32.f32 %v963
        %v1092 = vcvt.s32.f32 %v964
        %v1093 = vcvt.s32.f32 %v965
        %v1094 = vcvt.s32.f32 %v966
        %v1095 = vcvt.s32.f32 %v967
        %v1096 = vcvt.s32.f32 %v968
        %v1097 = vcvt.s32.f32 %v969
        %v1098 = vcvt.s32.f32 %v970
        %v1099 = vcvt.s32.f32 %v971
        %v1100 = vcvt.s32.f32 %v972
        %v1101 = vcvt.s32.f32 %v973
        %v1102 = vcvt.s32.f32 %v974
        %v1103 = vcvt.s32.f32 %v975
        %v1104 = vcvt.s32.f32 %v976
        %v1105 = vcvt.s32.f32 %v977
        %v1106 = vcvt.s32.f32 %v978
        %v1107 = vcvt.s32.f32 %v979
        %v1108 = vcvt.s32.f32 %v980
        %v1109 = vcvt.s32.f32 %v981
        %v1110 = vcvt.s32.f32 %v982
        %v1111 = vcvt.s32.f32 %v983
        %v1112 = vcvt.s32.f32 %v984
        %v1113 = vcvt.s32.f32 %v985
        %v1114 = vcvt.s32.f32 %v986
        %v1115 = vcvt.s32.f32 %v987
        %v1116 = vcvt.s32.f32 %v988
        %v1117 = vcvt.s32.f32 %v989
        %v1118 = vcvt.s32.f32 %v990
        %v1119 = vcvt.s32.f32 %v991
        %v1120 = vcvt.s32.f32 %v992
        %v1121 = vcvt.s32.f32 %v993
        %v1122 = vcvt.s32.f32 %v994
        %v1123 = vcvt.s32.f32 %v995
        %v1124 = vcvt.s32.f32 %v996
        %v1125 = vcvt.s32.f32 %v997
        %v1126 = vcvt.s32.f32 %v998
        %v1127 = vcvt.s32.f32 %v999
        %v1128 = vcvt.s32.f32 %v1000
        %v1129 = vld [vmem:[#allocation7] sm:$0xff]
        %v1130 = vld [vmem:[#allocation7 + $0x8] sm:$0xff]
        %v1131 = vld [vmem:[#allocation7 + $0x10] sm:$0xff]
        %v1132 = vld [vmem:[#allocation7 + $0x18] sm:$0xff]
        %v1133 = vld [vmem:[#allocation7 + $0x20] sm:$0xff]
        %v1134 = vld [vmem:[#allocation7 + $0x28] sm:$0xff]
        %v1135 = vld [vmem:[#allocation7 + $0x30] sm:$0xff]
        %v1136 = vld [vmem:[#allocation7 + $0x38] sm:$0xff]
        %v1137 = vld [vmem:[#allocation7 + $0x40] sm:$0xff]
        %v1138 = vld [vmem:[#allocation7 + $0x48] sm:$0xff]
        %v1139 = vld [vmem:[#allocation7 + $0x50] sm:$0xff]
        %v1140 = vld [vmem:[#allocation7 + $0x58] sm:$0xff]
        %v1141 = vld [vmem:[#allocation7 + $0x60] sm:$0xff]
        %v1142 = vld [vmem:[#allocation7 + $0x68] sm:$0xff]
        %v1143 = vld [vmem:[#allocation7 + $0x70] sm:$0xff]
        %v1144 = vld [vmem:[#allocation7 + $0x78] sm:$0xff]
        %v1145 = vld [vmem:[#allocation7 + $0x80] sm:$0xff]
        %v1146 = vld [vmem:[#allocation7 + $0x88] sm:$0xff]
        %v1147 = vld [vmem:[#allocation7 + $0x90] sm:$0xff]
        %v1148 = vld [vmem:[#allocation7 + $0x98] sm:$0xff]
        %1149 = vmatpush.msra.mxu0 %v644
        %1150 = vmatpush.msra.mxu0 %v642
        %1151 = vmatpush.msra.mxu0 %v640
        %1152 = vmatpush.msra.mxu0 %v638
        %1153 = vmatpush.msra.mxu0 %v636
        %1154 = vmatpush.msra.mxu0 %v634
        %1155 = vmatpush.msra.mxu0 %v632
        %1156 = vmatpush.msra.mxu0 %v630
        %1157 = vmatpush.msra.mxu0 %v628
        %1158 = vmatpush.msra.mxu0 %v626
        %1159 = vmatpush.msra.mxu0 %v624
        %1160 = vmatpush.msra.mxu0 %v622
        %1161 = vmatpush.msra.mxu0 %v620
        %1162 = vmatpush.msra.mxu0 %v618
        %1163 = vmatpush.msra.mxu0 %v616
        %1164 = vmatpush.msra.mxu0 %v614
        %1165 = vmatmul.f32.gmra.mxu0 %v1129
        %v1166 = vpop.f32.mrf.mxu0
        %v1167 = vadd.f32 0.0, %v1166
        %1168 = vmatmul.f32.gmra.mxu0 %v1133
        %v1169 = vpop.f32.mrf.mxu0
        %v1170 = vadd.f32 0.0, %v1169
        %1171 = vmatmul.f32.gmra.mxu0 %v1137
        %v1172 = vpop.f32.mrf.mxu0
        %v1173 = vadd.f32 0.0, %v1172
        %1174 = vmatmul.f32.gmra.mxu0 %v1141
        %v1175 = vpop.f32.mrf.mxu0
        %v1176 = vadd.f32 0.0, %v1175
        %1177 = vmatmul.f32.gmra.mxu0 %v1145
        %v1178 = vpop.f32.mrf.mxu0
        %v1179 = vadd.f32 0.0, %v1178
        %1180 = vdwg.mxu0
        %1181 = vmatpush.msra.mxu0 %v676
        %1182 = vmatpush.msra.mxu0 %v674
        %1183 = vmatpush.msra.mxu0 %v672
        %1184 = vmatpush.msra.mxu0 %v670
        %1185 = vmatpush.msra.mxu0 %v668
        %1186 = vmatpush.msra.mxu0 %v666
        %1187 = vmatpush.msra.mxu0 %v664
        %1188 = vmatpush.msra.mxu0 %v662
        %1189 = vmatpush.msra.mxu0 %v660
        %1190 = vmatpush.msra.mxu0 %v658
        %1191 = vmatpush.msra.mxu0 %v656
        %1192 = vmatpush.msra.mxu0 %v654
        %1193 = vmatpush.msra.mxu0 %v652
        %1194 = vmatpush.msra.mxu0 %v650
        %1195 = vmatpush.msra.mxu0 %v648
        %1196 = vmatpush.msra.mxu0 %v646
        %1197 = vmatmul.f32.gmra.mxu0 %v1130
        %v1198 = vpop.f32.mrf.mxu0
        %v1199 = vadd.f32 %v1167, %v1198
        %1200 = vmatmul.f32.gmra.mxu0 %v1134
        %v1201 = vpop.f32.mrf.mxu0
        %v1202 = vadd.f32 %v1170, %v1201
        %1203 = vmatmul.f32.gmra.mxu0 %v1138
        %v1204 = vpop.f32.mrf.mxu0
        %v1205 = vadd.f32 %v1173, %v1204
        %1206 = vmatmul.f32.gmra.mxu0 %v1142
        %v1207 = vpop.f32.mrf.mxu0
        %v1208 = vadd.f32 %v1176, %v1207
        %1209 = vmatmul.f32.gmra.mxu0 %v1146
        %v1210 = vpop.f32.mrf.mxu0
        %v1211 = vadd.f32 %v1179, %v1210
        %1212 = vdwg.mxu0
        %1213 = vmatpush.msra.mxu0 %v708
        %1214 = vmatpush.msra.mxu0 %v706
        %1215 = vmatpush.msra.mxu0 %v704
        %1216 = vmatpush.msra.mxu0 %v702
        %1217 = vmatpush.msra.mxu0 %v700
        %1218 = vmatpush.msra.mxu0 %v698
        %1219 = vmatpush.msra.mxu0 %v696
        %1220 = vmatpush.msra.mxu0 %v694
        %1221 = vmatpush.msra.mxu0 %v692
        %1222 = vmatpush.msra.mxu0 %v690
        %1223 = vmatpush.msra.mxu0 %v688
        %1224 = vmatpush.msra.mxu0 %v686
        %1225 = vmatpush.msra.mxu0 %v684
        %1226 = vmatpush.msra.mxu0 %v682
        %1227 = vmatpush.msra.mxu0 %v680
        %1228 = vmatpush.msra.mxu0 %v678
        %1229 = vmatmul.f32.gmra.mxu0 %v1131
        %v1230 = vpop.f32.mrf.mxu0
        %v1231 = vadd.f32 %v1199, %v1230
        %1232 = vmatmul.f32.gmra.mxu0 %v1135
        %v1233 = vpop.f32.mrf.mxu0
        %v1234 = vadd.f32 %v1202, %v1233
        %1235 = vmatmul.f32.gmra.mxu0 %v1139
        %v1236 = vpop.f32.mrf.mxu0
        %v1237 = vadd.f32 %v1205, %v1236
        %1238 = vmatmul.f32.gmra.mxu0 %v1143
        %v1239 = vpop.f32.mrf.mxu0
        %v1240 = vadd.f32 %v1208, %v1239
        %1241 = vmatmul.f32.gmra.mxu0 %v1147
        %v1242 = vpop.f32.mrf.mxu0
        %v1243 = vadd.f32 %v1211, %v1242
        %1244 = vdwg.mxu0
        %1245 = vmatpush.msra.mxu0 %v740
        %1246 = vmatpush.msra.mxu0 %v738
        %1247 = vmatpush.msra.mxu0 %v736
        %1248 = vmatpush.msra.mxu0 %v734
        %1249 = vmatpush.msra.mxu0 %v732
        %1250 = vmatpush.msra.mxu0 %v730
        %1251 = vmatpush.msra.mxu0 %v728
        %1252 = vmatpush.msra.mxu0 %v726
        %1253 = vmatpush.msra.mxu0 %v724
        %1254 = vmatpush.msra.mxu0 %v722
        %1255 = vmatpush.msra.mxu0 %v720
        %1256 = vmatpush.msra.mxu0 %v718
        %1257 = vmatpush.msra.mxu0 %v716
        %1258 = vmatpush.msra.mxu0 %v714
        %1259 = vmatpush.msra.mxu0 %v712
        %1260 = vmatpush.msra.mxu0 %v710
        %1261 = vmatmul.f32.gmra.mxu0 %v1132
        %v1262 = vpop.f32.mrf.mxu0
        %v1263 = vadd.f32 %v1231, %v1262
        %1264 = vmatmul.f32.gmra.mxu0 %v1136
        %v1265 = vpop.f32.mrf.mxu0
        %v1266 = vadd.f32 %v1234, %v1265
        %1267 = vmatmul.f32.gmra.mxu0 %v1140
        %v1268 = vpop.f32.mrf.mxu0
        %v1269 = vadd.f32 %v1237, %v1268
        %1270 = vmatmul.f32.gmra.mxu0 %v1144
        %v1271 = vpop.f32.mrf.mxu0
        %v1272 = vadd.f32 %v1240, %v1271
        %1273 = vmatmul.f32.gmra.mxu0 %v1148
        %v1274 = vpop.f32.mrf.mxu0
        %v1275 = vadd.f32 %v1243, %v1274
        %1276 = vdwg.mxu0
        %1277 = vmatpush.msra.mxu0 %v645
        %1278 = vmatpush.msra.mxu0 %v643
        %1279 = vmatpush.msra.mxu0 %v641
        %1280 = vmatpush.msra.mxu0 %v639
        %1281 = vmatpush.msra.mxu0 %v637
        %1282 = vmatpush.msra.mxu0 %v635
        %1283 = vmatpush.msra.mxu0 %v633
        %1284 = vmatpush.msra.mxu0 %v631
        %1285 = vmatpush.msra.mxu0 %v629
        %1286 = vmatpush.msra.mxu0 %v627
        %1287 = vmatpush.msra.mxu0 %v625
        %1288 = vmatpush.msra.mxu0 %v623
        %1289 = vmatpush.msra.mxu0 %v621
        %1290 = vmatpush.msra.mxu0 %v619
        %1291 = vmatpush.msra.mxu0 %v617
        %1292 = vmatpush.msra.mxu0 %v615
        %1293 = vmatmul.f32.gmra.mxu0 %v1129
        %v1294 = vpop.f32.mrf.mxu0
        %v1295 = vadd.f32 0.0, %v1294
        %1296 = vmatmul.f32.gmra.mxu0 %v1133
        %v1297 = vpop.f32.mrf.mxu0
        %v1298 = vadd.f32 0.0, %v1297
        %1299 = vmatmul.f32.gmra.mxu0 %v1137
        %v1300 = vpop.f32.mrf.mxu0
        %v1301 = vadd.f32 0.0, %v1300
        %1302 = vmatmul.f32.gmra.mxu0 %v1141
        %v1303 = vpop.f32.mrf.mxu0
        %v1304 = vadd.f32 0.0, %v1303
        %1305 = vmatmul.f32.gmra.mxu0 %v1145
        %v1306 = vpop.f32.mrf.mxu0
        %v1307 = vadd.f32 0.0, %v1306
        %1308 = vdwg.mxu0
        %1309 = vmatpush.msra.mxu0 %v677
        %1310 = vmatpush.msra.mxu0 %v675
        %1311 = vmatpush.msra.mxu0 %v673
        %1312 = vmatpush.msra.mxu0 %v671
        %1313 = vmatpush.msra.mxu0 %v669
        %1314 = vmatpush.msra.mxu0 %v667
        %1315 = vmatpush.msra.mxu0 %v665
        %1316 = vmatpush.msra.mxu0 %v663
        %1317 = vmatpush.msra.mxu0 %v661
        %1318 = vmatpush.msra.mxu0 %v659
        %1319 = vmatpush.msra.mxu0 %v657
        %1320 = vmatpush.msra.mxu0 %v655
        %1321 = vmatpush.msra.mxu0 %v653
        %1322 = vmatpush.msra.mxu0 %v651
        %1323 = vmatpush.msra.mxu0 %v649
        %1324 = vmatpush.msra.mxu0 %v647
        %1325 = vmatmul.f32.gmra.mxu0 %v1130
        %v1326 = vpop.f32.mrf.mxu0
        %v1327 = vadd.f32 %v1295, %v1326
        %1328 = vmatmul.f32.gmra.mxu0 %v1134
        %v1329 = vpop.f32.mrf.mxu0
        %v1330 = vadd.f32 %v1298, %v1329
        %1331 = vmatmul.f32.gmra.mxu0 %v1138
        %v1332 = vpop.f32.mrf.mxu0
        %v1333 = vadd.f32 %v1301, %v1332
        %1334 = vmatmul.f32.gmra.mxu0 %v1142
        %v1335 = vpop.f32.mrf.mxu0
        %v1336 = vadd.f32 %v1304, %v1335
        %1337 = vmatmul.f32.gmra.mxu0 %v1146
        %v1338 = vpop.f32.mrf.mxu0
        %v1339 = vadd.f32 %v1307, %v1338
        %1340 = vdwg.mxu0
        %1341 = vmatpush.msra.mxu0 %v709
        %1342 = vmatpush.msra.mxu0 %v707
        %1343 = vmatpush.msra.mxu0 %v705
        %1344 = vmatpush.msra.mxu0 %v703
        %1345 = vmatpush.msra.mxu0 %v701
        %1346 = vmatpush.msra.mxu0 %v699
        %1347 = vmatpush.msra.mxu0 %v697
        %1348 = vmatpush.msra.mxu0 %v695
        %1349 = vmatpush.msra.mxu0 %v693
        %1350 = vmatpush.msra.mxu0 %v691
        %1351 = vmatpush.msra.mxu0 %v689
        %1352 = vmatpush.msra.mxu0 %v687
        %1353 = vmatpush.msra.mxu0 %v685
        %1354 = vmatpush.msra.mxu0 %v683
        %1355 = vmatpush.msra.mxu0 %v681
        %1356 = vmatpush.msra.mxu0 %v679
        %1357 = vmatmul.f32.gmra.mxu0 %v1131
        %v1358 = vpop.f32.mrf.mxu0
        %v1359 = vadd.f32 %v1327, %v1358
        %1360 = vmatmul.f32.gmra.mxu0 %v1135
        %v1361 = vpop.f32.mrf.mxu0
        %v1362 = vadd.f32 %v1330, %v1361
        %1363 = vmatmul.f32.gmra.mxu0 %v1139
        %v1364 = vpop.f32.mrf.mxu0
        %v1365 = vadd.f32 %v1333, %v1364
        %1366 = vmatmul.f32.gmra.mxu0 %v1143
        %v1367 = vpop.f32.mrf.mxu0
        %v1368 = vadd.f32 %v1336, %v1367
        %1369 = vmatmul.f32.gmra.mxu0 %v1147
        %v1370 = vpop.f32.mrf.mxu0
        %v1371 = vadd.f32 %v1339, %v1370
        %1372 = vdwg.mxu0
        %1373 = vmatpush.msra.mxu0 %v741
        %1374 = vmatpush.msra.mxu0 %v739
        %1375 = vmatpush.msra.mxu0 %v737
        %1376 = vmatpush.msra.mxu0 %v735
        %1377 = vmatpush.msra.mxu0 %v733
        %1378 = vmatpush.msra.mxu0 %v731
        %1379 = vmatpush.msra.mxu0 %v729
        %1380 = vmatpush.msra.mxu0 %v727
        %1381 = vmatpush.msra.mxu0 %v725
        %1382 = vmatpush.msra.mxu0 %v723
        %1383 = vmatpush.msra.mxu0 %v721
        %1384 = vmatpush.msra.mxu0 %v719
        %1385 = vmatpush.msra.mxu0 %v717
        %1386 = vmatpush.msra.mxu0 %v715
        %1387 = vmatpush.msra.mxu0 %v713
        %1388 = vmatpush.msra.mxu0 %v711
        %1389 = vmatmul.f32.gmra.mxu0 %v1132
        %v1390 = vpop.f32.mrf.mxu0
        %v1391 = vadd.f32 %v1359, %v1390
        %1392 = vmatmul.f32.gmra.mxu0 %v1136
        %v1393 = vpop.f32.mrf.mxu0
        %v1394 = vadd.f32 %v1362, %v1393
        %1395 = vmatmul.f32.gmra.mxu0 %v1140
        %v1396 = vpop.f32.mrf.mxu0
        %v1397 = vadd.f32 %v1365, %v1396
        %1398 = vmatmul.f32.gmra.mxu0 %v1144
        %v1399 = vpop.f32.mrf.mxu0
        %v1400 = vadd.f32 %v1368, %v1399
        %1401 = vmatmul.f32.gmra.mxu0 %v1148
        %v1402 = vpop.f32.mrf.mxu0
        %v1403 = vadd.f32 %v1371, %v1402
        %1404 = vdwg.mxu0
        %v1405 = vld [vmem:[#allocation8] sm:$0xff]
        %v1406 = vld [vmem:[#allocation8 + $0x8] sm:$0xff]
        %v1407 = vld [vmem:[#allocation8 + $0x10] sm:$0xff]
        %v1408 = vld [vmem:[#allocation8 + $0x18] sm:$0xff]
        %v1409 = vld [vmem:[#allocation8 + $0x20] sm:$0xff]
        %v1410 = vld [vmem:[#allocation8 + $0x28] sm:$0xff]
        %v1411 = vld [vmem:[#allocation8 + $0x30] sm:$0xff]
        %v1412 = vld [vmem:[#allocation8 + $0x38] sm:$0xff]
        %v1413 = vld [vmem:[#allocation8 + $0x40] sm:$0xff]
        %v1414 = vld [vmem:[#allocation8 + $0x48] sm:$0xff]
        %v1415 = vld [vmem:[#allocation8 + $0x50] sm:$0xff]
        %v1416 = vld [vmem:[#allocation8 + $0x58] sm:$0xff]
        %v1417 = vld [vmem:[#allocation8 + $0x60] sm:$0xff]
        %v1418 = vld [vmem:[#allocation8 + $0x68] sm:$0xff]
        %v1419 = vld [vmem:[#allocation8 + $0x70] sm:$0xff]
        %v1420 = vld [vmem:[#allocation8 + $0x78] sm:$0xff]
        %v1421 = vld [vmem:[#allocation8 + $0x80] sm:$0xff]
        %v1422 = vld [vmem:[#allocation8 + $0x88] sm:$0xff]
        %v1423 = vld [vmem:[#allocation8 + $0x90] sm:$0xff]
        %v1424 = vld [vmem:[#allocation8 + $0x98] sm:$0xff]
        %1425 = vmatpush.msra.mxu0 %v1031
        %1426 = vmatpush.msra.mxu0 %v1029
        %1427 = vmatpush.msra.mxu0 %v1027
        %1428 = vmatpush.msra.mxu0 %v1025
        %1429 = vmatpush.msra.mxu0 %v1023
        %1430 = vmatpush.msra.mxu0 %v1021
        %1431 = vmatpush.msra.mxu0 %v1019
        %1432 = vmatpush.msra.mxu0 %v1017
        %1433 = vmatpush.msra.mxu0 %v1015
        %1434 = vmatpush.msra.mxu0 %v1013
        %1435 = vmatpush.msra.mxu0 %v1011
        %1436 = vmatpush.msra.mxu0 %v1009
        %1437 = vmatpush.msra.mxu0 %v1007
        %1438 = vmatpush.msra.mxu0 %v1005
        %1439 = vmatpush.msra.mxu0 %v1003
        %1440 = vmatpush.msra.mxu0 %v1001
        %1441 = vmatmul.f32.gmra.mxu0 %v1405
        %v1442 = vpop.f32.mrf.mxu0
        %v1443 = vadd.f32 0.0, %v1442
        %1444 = vmatmul.f32.gmra.mxu0 %v1409
        %v1445 = vpop.f32.mrf.mxu0
        %v1446 = vadd.f32 0.0, %v1445
        %1447 = vmatmul.f32.gmra.mxu0 %v1413
        %v1448 = vpop.f32.mrf.mxu0
        %v1449 = vadd.f32 0.0, %v1448
        %1450 = vmatmul.f32.gmra.mxu0 %v1417
        %v1451 = vpop.f32.mrf.mxu0
        %v1452 = vadd.f32 0.0, %v1451
        %1453 = vmatmul.f32.gmra.mxu0 %v1421
        %v1454 = vpop.f32.mrf.mxu0
        %v1455 = vadd.f32 0.0, %v1454
        %1456 = vdwg.mxu0
        %1457 = vmatpush.msra.mxu0 %v1063
        %1458 = vmatpush.msra.mxu0 %v1061
        %1459 = vmatpush.msra.mxu0 %v1059
        %1460 = vmatpush.msra.mxu0 %v1057
        %1461 = vmatpush.msra.mxu0 %v1055
        %1462 = vmatpush.msra.mxu0 %v1053
        %1463 = vmatpush.msra.mxu0 %v1051
        %1464 = vmatpush.msra.mxu0 %v1049
        %1465 = vmatpush.msra.mxu0 %v1047
        %1466 = vmatpush.msra.mxu0 %v1045
        %1467 = vmatpush.msra.mxu0 %v1043
        %1468 = vmatpush.msra.mxu0 %v1041
        %1469 = vmatpush.msra.mxu0 %v1039
        %1470 = vmatpush.msra.mxu0 %v1037
        %1471 = vmatpush.msra.mxu0 %v1035
        %1472 = vmatpush.msra.mxu0 %v1033
        %1473 = vmatmul.f32.gmra.mxu0 %v1406
        %v1474 = vpop.f32.mrf.mxu0
        %v1475 = vadd.f32 %v1443, %v1474
        %1476 = vmatmul.f32.gmra.mxu0 %v1410
        %v1477 = vpop.f32.mrf.mxu0
        %v1478 = vadd.f32 %v1446, %v1477
        %1479 = vmatmul.f32.gmra.mxu0 %v1414
        %v1480 = vpop.f32.mrf.mxu0
        %v1481 = vadd.f32 %v1449, %v1480
        %1482 = vmatmul.f32.gmra.mxu0 %v1418
        %v1483 = vpop.f32.mrf.mxu0
        %v1484 = vadd.f32 %v1452, %v1483
        %1485 = vmatmul.f32.gmra.mxu0 %v1422
        %v1486 = vpop.f32.mrf.mxu0
        %v1487 = vadd.f32 %v1455, %v1486
        %1488 = vdwg.mxu0
        %1489 = vmatpush.msra.mxu0 %v1095
        %1490 = vmatpush.msra.mxu0 %v1093
        %1491 = vmatpush.msra.mxu0 %v1091
        %1492 = vmatpush.msra.mxu0 %v1089
        %1493 = vmatpush.msra.mxu0 %v1087
        %1494 = vmatpush.msra.mxu0 %v1085
        %1495 = vmatpush.msra.mxu0 %v1083
        %1496 = vmatpush.msra.mxu0 %v1081
        %1497 = vmatpush.msra.mxu0 %v1079
        %1498 = vmatpush.msra.mxu0 %v1077
        %1499 = vmatpush.msra.mxu0 %v1075
        %1500 = vmatpush.msra.mxu0 %v1073
        %1501 = vmatpush.msra.mxu0 %v1071
        %1502 = vmatpush.msra.mxu0 %v1069
        %1503 = vmatpush.msra.mxu0 %v1067
        %1504 = vmatpush.msra.mxu0 %v1065
        %1505 = vmatmul.f32.gmra.mxu0 %v1407
        %v1506 = vpop.f32.mrf.mxu0
        %v1507 = vadd.f32 %v1475, %v1506
        %1508 = vmatmul.f32.gmra.mxu0 %v1411
        %v1509 = vpop.f32.mrf.mxu0
        %v1510 = vadd.f32 %v1478, %v1509
        %1511 = vmatmul.f32.gmra.mxu0 %v1415
        %v1512 = vpop.f32.mrf.mxu0
        %v1513 = vadd.f32 %v1481, %v1512
        %1514 = vmatmul.f32.gmra.mxu0 %v1419
        %v1515 = vpop.f32.mrf.mxu0
        %v1516 = vadd.f32 %v1484, %v1515
        %1517 = vmatmul.f32.gmra.mxu0 %v1423
        %v1518 = vpop.f32.mrf.mxu0
        %v1519 = vadd.f32 %v1487, %v1518
        %1520 = vdwg.mxu0
        %1521 = vmatpush.msra.mxu0 %v1127
        %1522 = vmatpush.msra.mxu0 %v1125
        %1523 = vmatpush.msra.mxu0 %v1123
        %1524 = vmatpush.msra.mxu0 %v1121
        %1525 = vmatpush.msra.mxu0 %v1119
        %1526 = vmatpush.msra.mxu0 %v1117
        %1527 = vmatpush.msra.mxu0 %v1115
        %1528 = vmatpush.msra.mxu0 %v1113
        %1529 = vmatpush.msra.mxu0 %v1111
        %1530 = vmatpush.msra.mxu0 %v1109
        %1531 = vmatpush.msra.mxu0 %v1107
        %1532 = vmatpush.msra.mxu0 %v1105
        %1533 = vmatpush.msra.mxu0 %v1103
        %1534 = vmatpush.msra.mxu0 %v1101
        %1535 = vmatpush.msra.mxu0 %v1099
        %1536 = vmatpush.msra.mxu0 %v1097
        %1537 = vmatmul.f32.gmra.mxu0 %v1408
        %v1538 = vpop.f32.mrf.mxu0
        %v1539 = vadd.f32 %v1507, %v1538
        %1540 = vmatmul.f32.gmra.mxu0 %v1412
        %v1541 = vpop.f32.mrf.mxu0
        %v1542 = vadd.f32 %v1510, %v1541
        %1543 = vmatmul.f32.gmra.mxu0 %v1416
        %v1544 = vpop.f32.mrf.mxu0
        %v1545 = vadd.f32 %v1513, %v1544
        %1546 = vmatmul.f32.gmra.mxu0 %v1420
        %v1547 = vpop.f32.mrf.mxu0
        %v1548 = vadd.f32 %v1516, %v1547
        %1549 = vmatmul.f32.gmra.mxu0 %v1424
        %v1550 = vpop.f32.mrf.mxu0
        %v1551 = vadd.f32 %v1519, %v1550
        %1552 = vdwg.mxu0
        %1553 = vmatpush.msra.mxu0 %v1032
        %1554 = vmatpush.msra.mxu0 %v1030
        %1555 = vmatpush.msra.mxu0 %v1028
        %1556 = vmatpush.msra.mxu0 %v1026
        %1557 = vmatpush.msra.mxu0 %v1024
        %1558 = vmatpush.msra.mxu0 %v1022
        %1559 = vmatpush.msra.mxu0 %v1020
        %1560 = vmatpush.msra.mxu0 %v1018
        %1561 = vmatpush.msra.mxu0 %v1016
        %1562 = vmatpush.msra.mxu0 %v1014
        %1563 = vmatpush.msra.mxu0 %v1012
        %1564 = vmatpush.msra.mxu0 %v1010
        %1565 = vmatpush.msra.mxu0 %v1008
        %1566 = vmatpush.msra.mxu0 %v1006
        %1567 = vmatpush.msra.mxu0 %v1004
        %1568 = vmatpush.msra.mxu0 %v1002
        %1569 = vmatmul.f32.gmra.mxu0 %v1405
        %v1570 = vpop.f32.mrf.mxu0
        %v1571 = vadd.f32 0.0, %v1570
        %1572 = vmatmul.f32.gmra.mxu0 %v1409
        %v1573 = vpop.f32.mrf.mxu0
        %v1574 = vadd.f32 0.0, %v1573
        %1575 = vmatmul.f32.gmra.mxu0 %v1413
        %v1576 = vpop.f32.mrf.mxu0
        %v1577 = vadd.f32 0.0, %v1576
        %1578 = vmatmul.f32.gmra.mxu0 %v1417
        %v1579 = vpop.f32.mrf.mxu0
        %v1580 = vadd.f32 0.0, %v1579
        %1581 = vmatmul.f32.gmra.mxu0 %v1421
        %v1582 = vpop.f32.mrf.mxu0
        %v1583 = vadd.f32 0.0, %v1582
        %1584 = vdwg.mxu0
        %1585 = vmatpush.msra.mxu0 %v1064
        %1586 = vmatpush.msra.mxu0 %v1062
        %1587 = vmatpush.msra.mxu0 %v1060
        %1588 = vmatpush.msra.mxu0 %v1058
        %1589 = vmatpush.msra.mxu0 %v1056
        %1590 = vmatpush.msra.mxu0 %v1054
        %1591 = vmatpush.msra.mxu0 %v1052
        %1592 = vmatpush.msra.mxu0 %v1050
        %1593 = vmatpush.msra.mxu0 %v1048
        %1594 = vmatpush.msra.mxu0 %v1046
        %1595 = vmatpush.msra.mxu0 %v1044
        %1596 = vmatpush.msra.mxu0 %v1042
        %1597 = vmatpush.msra.mxu0 %v1040
        %1598 = vmatpush.msra.mxu0 %v1038
        %1599 = vmatpush.msra.mxu0 %v1036
        %1600 = vmatpush.msra.mxu0 %v1034
        %1601 = vmatmul.f32.gmra.mxu0 %v1406
        %v1602 = vpop.f32.mrf.mxu0
        %v1603 = vadd.f32 %v1571, %v1602
        %1604 = vmatmul.f32.gmra.mxu0 %v1410
        %v1605 = vpop.f32.mrf.mxu0
        %v1606 = vadd.f32 %v1574, %v1605
        %1607 = vmatmul.f32.gmra.mxu0 %v1414
        %v1608 = vpop.f32.mrf.mxu0
        %v1609 = vadd.f32 %v1577, %v1608
        %1610 = vmatmul.f32.gmra.mxu0 %v1418
        %v1611 = vpop.f32.mrf.mxu0
        %v1612 = vadd.f32 %v1580, %v1611
        %1613 = vmatmul.f32.gmra.mxu0 %v1422
        %v1614 = vpop.f32.mrf.mxu0
        %v1615 = vadd.f32 %v1583, %v1614
        %1616 = vdwg.mxu0
        %1617 = vmatpush.msra.mxu0 %v1096
        %1618 = vmatpush.msra.mxu0 %v1094
        %1619 = vmatpush.msra.mxu0 %v1092
        %1620 = vmatpush.msra.mxu0 %v1090
        %1621 = vmatpush.msra.mxu0 %v1088
        %1622 = vmatpush.msra.mxu0 %v1086
        %1623 = vmatpush.msra.mxu0 %v1084
        %1624 = vmatpush.msra.mxu0 %v1082
        %1625 = vmatpush.msra.mxu0 %v1080
        %1626 = vmatpush.msra.mxu0 %v1078
        %1627 = vmatpush.msra.mxu0 %v1076
        %1628 = vmatpush.msra.mxu0 %v1074
        %1629 = vmatpush.msra.mxu0 %v1072
        %1630 = vmatpush.msra.mxu0 %v1070
        %1631 = vmatpush.msra.mxu0 %v1068
        %1632 = vmatpush.msra.mxu0 %v1066
        %1633 = vmatmul.f32.gmra.mxu0 %v1407
        %v1634 = vpop.f32.mrf.mxu0
        %v1635 = vadd.f32 %v1603, %v1634
        %1636 = vmatmul.f32.gmra.mxu0 %v1411
        %v1637 = vpop.f32.mrf.mxu0
        %v1638 = vadd.f32 %v1606, %v1637
        %1639 = vmatmul.f32.gmra.mxu0 %v1415
        %v1640 = vpop.f32.mrf.mxu0
        %v1641 = vadd.f32 %v1609, %v1640
        %1642 = vmatmul.f32.gmra.mxu0 %v1419
        %v1643 = vpop.f32.mrf.mxu0
        %v1644 = vadd.f32 %v1612, %v1643
        %1645 = vmatmul.f32.gmra.mxu0 %v1423
        %v1646 = vpop.f32.mrf.mxu0
        %v1647 = vadd.f32 %v1615, %v1646
        %1648 = vdwg.mxu0
        %1649 = vmatpush.msra.mxu0 %v1128
        %1650 = vmatpush.msra.mxu0 %v1126
        %1651 = vmatpush.msra.mxu0 %v1124
        %1652 = vmatpush.msra.mxu0 %v1122
        %1653 = vmatpush.msra.mxu0 %v1120
        %1654 = vmatpush.msra.mxu0 %v1118
        %1655 = vmatpush.msra.mxu0 %v1116
        %1656 = vmatpush.msra.mxu0 %v1114
        %1657 = vmatpush.msra.mxu0 %v1112
        %1658 = vmatpush.msra.mxu0 %v1110
        %1659 = vmatpush.msra.mxu0 %v1108
        %1660 = vmatpush.msra.mxu0 %v1106
        %1661 = vmatpush.msra.mxu0 %v1104
        %1662 = vmatpush.msra.mxu0 %v1102
        %1663 = vmatpush.msra.mxu0 %v1100
        %1664 = vmatpush.msra.mxu0 %v1098
        %1665 = vmatmul.f32.gmra.mxu0 %v1408
        %v1666 = vpop.f32.mrf.mxu0
        %v1667 = vadd.f32 %v1635, %v1666
        %1668 = vmatmul.f32.gmra.mxu0 %v1412
        %v1669 = vpop.f32.mrf.mxu0
        %v1670 = vadd.f32 %v1638, %v1669
        %1671 = vmatmul.f32.gmra.mxu0 %v1416
        %v1672 = vpop.f32.mrf.mxu0
        %v1673 = vadd.f32 %v1641, %v1672
        %1674 = vmatmul.f32.gmra.mxu0 %v1420
        %v1675 = vpop.f32.mrf.mxu0
        %v1676 = vadd.f32 %v1644, %v1675
        %1677 = vmatmul.f32.gmra.mxu0 %v1424
        %v1678 = vpop.f32.mrf.mxu0
        %v1679 = vadd.f32 %v1647, %v1678
        %1680 = vdwg.mxu0
        %v1681 = vmul.f32 %v1263, %v1539
        %v1682 = vmul.f32 %v1391, %v1667
        %v1683 = vmul.f32 %v1266, %v1542
        %v1684 = vmul.f32 %v1394, %v1670
        %v1685 = vmul.f32 %v1269, %v1545
        %v1686 = vmul.f32 %v1397, %v1673
        %v1687 = vmul.f32 %v1272, %v1548
        %v1688 = vmul.f32 %v1400, %v1676
        %v1689 = vmul.f32 %v1275, %v1551
        %v1690 = vmul.f32 %v1403, %v1679
        %v1691 = vadd.f32 %v1681, %v1683
        %v1692 = vadd.f32 %v1691, %v1685
        %v1693 = vadd.f32 %v1692, %v1687
        %v1694 = vadd.f32 %v1693, %v1689
        %v1695 = vrot.slane %v1694, 4
        %v1696 = vadd.f32 %v1694, %v1695
        %v1697 = vrot.slane %v1696, 2
        %v1698 = vadd.f32 %v1696, %v1697
        %v1699 = vrot.slane %v1698, 1
        %v1700 = vadd.f32 %v1698, %v1699
        %v1701 = vadd.f32 %v1682, %v1684
        %v1702 = vadd.f32 %v1701, %v1686
        %v1703 = vadd.f32 %v1702, %v1688
        %v1704 = vadd.f32 %v1703, %v1690
        %v1705 = vrot.slane %v1704, 4
        %v1706 = vadd.f32 %v1704, %v1705
        %v1707 = vrot.slane %v1706, 2
        %v1708 = vadd.f32 %v1706, %v1707
        %v1709 = vrot.slane %v1708, 1
        %v1710 = vadd.f32 %v1708, %v1709
        %v1713 = vrot.slane %v1710, 7
        %vm1714 = vcmask 1040384
        %v1715 = vsel %vm1714, %v1700, %v1713
        %v1717 = vlaneseq
        %vm1718 = vcmp.ge.s32.totalorder %v1717, 0
        %vm1719 = vcmp.lt.s32.totalorder %v1717, 256
        %vm1720 = vmand %vm1718, %vm1719
        %1721 = vst.msk [vmem:[%s286] sm:$0x3] %vm1720, %v1715
        %s1722 = sand.u32 %s127, 1
        %s1723 = scalar_lea.sflag [#allocation4], %s1722
        %s1724 = sand.u32 %s127, 1
        %s1725 = smul.addr %s1724, 2
        %s1726 = scalar_lea.vmem [#allocation10], %s1725
        // Predicated region
        $region53: #{_lambda_.1} parent=35 // pred_check
          %p1727 = pneg %p137
        $region54: #{_lambda_.1} parent=35 // pred_check_branch
          %1729 = sbr.rel (%p1727) target = $region56
        $region55: #{_lambda_.1} parent=35 // pred_region
          %s1730 = smul.u32 2, %s25
          %1732 = vsyncadd %s1723, 0
          %s1733 = scalar_lea.hbm %s4, %s1730
          %s1735 = sshll.u32 %s1726, 4
          %s1736 = int_to_ptr.vmem [resolvable:$true] %s1735
          %s1737 = sshll.u32 %s1733, 4
          %s1738 = int_to_ptr.hbm [resolvable:$true] %s1737
          %1740 = dma.vmem_to_hbm [thread:$0]  %s1736, 32, %s1738, %s1723
        $region56: #{_lambda_.1} parent=35 // pred_fallthru
          _
      $region36: #{_lambda_.1} parent=5 // pred_fallthru
        _
      %p1741 = scmp.le.s32.totalorder 2, %s20
      // Predicated region
      $region57: #{_lambda_.1} parent=5 // pred_check
        %p1742 = pneg %p1741
      $region58: #{_lambda_.1} parent=5 // pred_check_branch
        %1744 = sbr.rel (%p1742) target = $region60
      $region59: #{_lambda_.1} parent=5 // pred_region
        %s1745 = ssub.s32 %s20, 2
        // Predicated region
        $region61: #{_lambda_.1} parent=59 // pred_check
          %p1746 = pneg %p143
        $region62: #{_lambda_.1} parent=59 // pred_check_branch
          %1748 = sbr.rel (%p1746) target = $region64
        $region63: #{_lambda_.1} parent=59 // pred_region
          %s1749 = sand.u32 %s128, 1
          %s1750 = scalar_lea.sflag [#allocation4], %s1749
          %s1751 = sand.u32 %s128, 1
          %s1752 = smul.addr %s1751, 2
          %s1753 = scalar_lea.vmem [#allocation10], %s1752
          %1755 = dma.done %s1750, 32
        $region64: #{_lambda_.1} parent=59 // pred_fallthru
          _
      $region60: #{_lambda_.1} parent=5 // pred_fallthru
        _
    $region6: #{_lambda_.1} parent=1 // loop_footer
      %s24 = sadd.s32 1, %s20
    $region7: #{_lambda_.1} parent=1 // loop_footer_branch
      %19 = sbr.rel target = $region3
    $region8: #{_lambda_.1} parent=1 // loop_exit
      _
    %1756 = vsyncpa [#allocation3], 1
    %s1757 = scalar_lea.sflag [#allocation3], 1
    %1758 = vsyncpa %s1757, 1
    %1759 = vsyncpa [#allocation6], 1
    %s1760 = scalar_lea.sflag [#allocation6], 1
    %1761 = vsyncpa %s1760, 1
    %1762 = vsyncpa [#allocation9], 1
    %1763 = vsyncpa [#allocation4], 1
    %s1764 = scalar_lea.sflag [#allocation4], 1
    %1765 = vsyncpa %s1764, 1

</llo_original>
